<compile_context>
chip_gen: v7x
topology: tpu7x:2x2x1
jax: 0.10.0
libtpu: 0.0.40
codegen_flags: <defaults>
</compile_context>

<pallas_src>
import functools

import jax
import jax.numpy as jnp
from jax.experimental import pallas as pl
from jax.experimental.pallas import tpu as pltpu

PAD_F = 128      # lane-dense feature width used for features / weights / outputs
TILE_CAP = 1024  # max adjacency row/col tile (review: 512-1024)


# ----------------------------- kernel ---------------------------------------
def fused_gcn_kernel(adj_ref, x_ref, w_ref, b_ref, out_ref, h1_ref):
    """Fused 2-layer GCN.

    grid = (layer l, out-row tile i, reduce-col tile k); reduction axis last.
      l == 0: output block parks on block (0,0) and is used purely as the
              A@X accumulator; at the last k the Linear+ReLU result is stored
              into the h1 VMEM scratch tile i.
      l == 1: output block (i,0) accumulates A@h1; at the last k the Linear
              (+bias) result overwrites it in place and is written back to HBM.
    """
    l = pl.program_id(0)
    i = pl.program_id(1)
    k = pl.program_id(2)

    @pl.when(k == 0)
    def _init_acc():
        out_ref[...] = jnp.zeros_like(out_ref)

    # Adjacency streams as int8 (exact for 0/1 entries); promote to f32 so the
    # accumulation matches the f32 reference numerics.
    a = adj_ref[...].astype(jnp.float32)

    @pl.when(l == 0)
    def _accum_layer0():  # message passing over the (padded) input features
        out_ref[...] += jnp.dot(a, x_ref[...], preferred_element_type=jnp.float32)

    @pl.when(l == 1)
    def _accum_layer1():  # message passing over the VMEM-resident h1
        out_ref[...] += jnp.dot(a, h1_ref[k], preferred_element_type=jnp.float32)

    @pl.when(k == pl.num_programs(2) - 1)
    def _node_apply():    # Linear (+ReLU) once the K reduction is complete
        h = jnp.dot(out_ref[...], w_ref[...], preferred_element_type=jnp.float32)
        h = h + b_ref[...]

        @pl.when(l == 0)
        def _store_hidden():          # gcn1: ReLU, park h1 tile in VMEM
            h1_ref[i] = jnp.maximum(h, 0.0)

        @pl.when(l == 1)
        def _store_output():          # gcn2: final output tile (lane-dense)
            out_ref[...] = h


# ----------------------------- wrapper ---------------------------------------
def _plan_tiles(n):
    """Pad N to a multiple of 128; pick the largest 128-multiple tile <= TILE_CAP
    that divides the padded N (no single full NxN block fallback)."""
    n_pad = ((max(n, 1) + 127) // 128) * 128
    tile = 128
    for cand in range(min(TILE_CAP, n_pad), 127, -128):
        if n_pad % cand == 0:
            tile = cand
            break
    return n_pad, tile


def fused_gcn(adj_i8, x_pad, w_stack, b_stack):
    n_pad = adj_i8.shape[0]
    _, tile = _plan_tiles(n_pad)
    assert n_pad % tile == 0
    nt = n_pad // tile

    # Scoped-VMEM budget: streamed blocks are double-buffered; h1 is resident.
    need = (
        2 * (tile * tile                      # int8 adjacency tile
             + tile * PAD_F * 4               # feature tile (f32)
             + tile * PAD_F * 4               # output / accumulator tile (f32)
             + PAD_F * PAD_F * 4 + PAD_F * 4  # weights + bias
             )
        + nt * tile * PAD_F * 4               # resident h1 scratch
    )
    # <= 48 MiB keeps headroom on v7x's 64 MiB VMEM; v5e/v6e have 128 MiB.
    vmem_limit = int(min(max(need + (8 << 20), 32 << 20), 48 << 20))

    return pl.pallas_call(
        fused_gcn_kernel,
        out_shape=jax.ShapeDtypeStruct((n_pad, PAD_F), jnp.float32),
        grid_spec=pltpu.PrefetchScalarGridSpec(
            num_scalar_prefetch=0,
            grid=(2, nt, nt),  # (layer, row tile, reduce tile) -- reduction last
            in_specs=[
                # A[i, k] tile (int8)
                pl.BlockSpec((tile, tile), lambda l, i, k: (i, k)),
                # X[k] tile; only consumed by layer 0 (parks on block 0 in layer 1)
                pl.BlockSpec((tile, PAD_F), lambda l, i, k: (k * (1 - l), 0)),
                # per-layer padded weight / bias slabs (stacked along dim 0)
                pl.BlockSpec((None, PAD_F, PAD_F), lambda l, i, k: (l, 0, 0)),
                pl.BlockSpec((None, 1, PAD_F), lambda l, i, k: (l, 0, 0)),
            ],
            # Layer 0 parks on block (0,0) (pure accumulator scratch); layer 1
            # writes the lane-dense output row tiles (unmasked vst path).
            out_specs=pl.BlockSpec((tile, PAD_F), lambda l, i, k: (i * l, 0)),
            scratch_shapes=[pltpu.VMEM((nt, tile, PAD_F), jnp.float32)],  # h1
        ),
        compiler_params=pltpu.CompilerParams(
            dimension_semantics=("arbitrary", "arbitrary", "arbitrary"),
            vmem_limit_bytes=vmem_limit,
        ),
    )(adj_i8, x_pad, w_stack, b_stack)


def _pad2(a, rows, cols):
    return jnp.zeros((rows, cols), jnp.float32).at[: a.shape[0], : a.shape[1]].set(
        a.astype(jnp.float32)
    )


def prepare_params(w1, b1, w2, b2):
    """Pad both layers' weights/biases to lane-dense 128-wide slabs and stack
    them ONCE (hoisted out of the per-call path)."""
    w_stack = jnp.stack([_pad2(w1, PAD_F, PAD_F), _pad2(w2, PAD_F, PAD_F)])
    b_stack = jnp.stack([_pad2(b1[None, :], 1, PAD_F), _pad2(b2[None, :], 1, PAD_F)])
    return w_stack, b_stack


def prepare_inputs(adj, feats):
    """Zero-pad the node count to a 128 multiple, pad features to the 128-wide
    slab, and store the adjacency as int8 (exact for 0/1).  Runs once per graph,
    outside the jitted forward."""
    n, f_in = feats.shape
    n_pad, _ = _plan_tiles(n)
    adj_i8 = jnp.zeros((n_pad, n_pad), jnp.int8).at[:n, :n].set(adj.astype(jnp.int8))
    x_pad = jnp.zeros((n_pad, PAD_F), jnp.float32).at[:n, :f_in].set(
        feats.astype(jnp.float32)
    )
    return adj_i8, x_pad


@functools.partial(jax.jit, static_argnames=("n", "f_out"))
def net_forward(adj_i8, x_pad, w_stack, b_stack, *, n, f_out=1):
    """adj_i8: [Npad, Npad] int8 0/1; x_pad: [Npad, 128] f32; stacked padded params."""
    y = fused_gcn(adj_i8, x_pad, w_stack, b_stack)
    return y[:n, :f_out]


def reference_forward(adj, feats, w1, b1, w2, b2):
    pr = jax.lax.Precision.HIGHEST  # true-f32 reference
    h = jnp.dot(adj, feats, precision=pr)
    h = jnp.maximum(jnp.dot(h, w1, precision=pr) + b1, 0.0)
    h = jnp.dot(adj, h, precision=pr)
    return jnp.dot(h, w2, precision=pr) + b2


# ------------------------------- demo ----------------------------------------
if __name__ == "__main__":
    N, F_IN, F_HID, F_OUT = 256, 10, 16, 1

    key = jax.random.PRNGKey(0)
    k_adj, k_feat, k_w1, k_b1, k_w2, k_b2 = jax.random.split(key, 6)

    # Deterministic random graph: dense adjacency A[i, j] = 1 iff edge j -> i,
    # plus self-loops so every node has at least one in-edge.
    adj = (jax.random.uniform(k_adj, (N, N)) < 0.05).astype(jnp.float32)
    adj = jnp.maximum(adj, jnp.eye(N, dtype=jnp.float32))

    features = jax.random.normal(k_feat, (N, F_IN), dtype=jnp.float32)

    # nn.Linear-style init (uniform +/- 1/sqrt(fan_in)); stored as [in, out]
    # (transpose of PyTorch's [out, in]) so the apply step is h @ W + b.
    lim1 = 1.0 / jnp.sqrt(F_IN)
    w1 = jax.random.uniform(k_w1, (F_IN, F_HID), minval=-lim1, maxval=lim1)
    b1 = jax.random.uniform(k_b1, (F_HID,), minval=-lim1, maxval=lim1)
    lim2 = 1.0 / jnp.sqrt(F_HID)
    w2 = jax.random.uniform(k_w2, (F_HID, F_OUT), minval=-lim2, maxval=lim2)
    b2 = jax.random.uniform(k_b2, (F_OUT,), minval=-lim2, maxval=lim2)

    w_stack, b_stack = prepare_params(w1, b1, w2, b2)   # padded/stacked once
    adj_i8, x_pad = prepare_inputs(adj, features)       # padded / int8 once

    out = net_forward(adj_i8, x_pad, w_stack, b_stack, n=N, f_out=F_OUT)
    out = jax.block_until_ready(out)

    ref = reference_forward(adj, features, w1, b1, w2, b2)
    assert out.shape == (N, F_OUT), out.shape
    assert jnp.allclose(out, ref, atol=1e-4, rtol=1e-4), "mismatch vs reference"

    print("KERNEL_OK")
</pallas_src>

<mosaic_0001>
module attributes {stable_mosaic.version = 11 : i64} {
  func.func @fused_gcn_kernel(%arg0: i32, %arg1: i32, %arg2: i32, %arg3: memref<256x256xi8, #tpu.memory_space<vmem>>, %arg4: memref<256x128xf32, #tpu.memory_space<vmem>>, %arg5: memref<1x128x128xf32, #tpu.memory_space<vmem>>, %arg6: memref<1x1x128xf32, #tpu.memory_space<vmem>>, %arg7: memref<256x128xf32, #tpu.memory_space<vmem>>, %arg8: memref<1x256x128xf32, #tpu.memory_space<vmem>>) attributes {dimension_semantics = [#tpu.dimension_semantics<arbitrary>, #tpu.dimension_semantics<arbitrary>, #tpu.dimension_semantics<arbitrary>], iteration_bounds = array<i64: 2, 1, 1>, scalar_prefetch = 0 : i64, scratch_operands = 1 : i64, tpu.core_type = #tpu.core_type<tc>, window_params = [{transform_indices = @transform_0, window_bounds = array<i64: 256, 256>}, {transform_indices = @transform_1, window_bounds = array<i64: 256, 128>}, {transform_indices = @transform_2, window_bounds = array<i64: 1, 128, 128>}, {transform_indices = @transform_3, window_bounds = array<i64: 1, 1, 128>}, {transform_indices = @transform_4, window_bounds = array<i64: 256, 128>}]} {
    %c0_i32 = arith.constant 0 : i32
    %0 = arith.cmpi eq, %arg2, %c0_i32 : i32
    %1 = arith.extui %0 : i1 to i32
    %c0_i32_0 = arith.constant 0 : i32
    %2 = arith.cmpi ne, %1, %c0_i32_0 : i32
    scf.if %2 {
      %cst = arith.constant 0.000000e+00 : f32
      %14 = vector.broadcast %cst : f32 to vector<256x128xf32>
      %c0_7 = arith.constant 0 : index
      %c0_8 = arith.constant 0 : index
      %15 = vector.load %arg7[%c0_7, %c0_8] : memref<256x128xf32, #tpu.memory_space<vmem>>, vector<256x128xf32>
      tpu.vector_store %arg7[%c0_7, %c0_8], %14 {strides = array<i32>} : memref<256x128xf32, #tpu.memory_space<vmem>>, vector<256x128xf32>,
    } else {
    }
    %c0 = arith.constant 0 : index
    %c0_1 = arith.constant 0 : index
    %3 = vector.load %arg3[%c0, %c0_1] : memref<256x256xi8, #tpu.memory_space<vmem>>, vector<256x256xi8>
    %4 = arith.sitofp %3 : vector<256x256xi8> to vector<256x256xf32>
    %c0_i32_2 = arith.constant 0 : i32
    %5 = arith.cmpi eq, %arg0, %c0_i32_2 : i32
    %6 = arith.extui %5 : i1 to i32
    %c0_i32_3 = arith.constant 0 : i32
    %7 = arith.cmpi ne, %6, %c0_i32_3 : i32
    scf.if %7 {
      %c0_7 = arith.constant 0 : index
      %c0_8 = arith.constant 0 : index
      %14 = vector.load %arg7[%c0_7, %c0_8] : memref<256x128xf32, #tpu.memory_space<vmem>>, vector<256x128xf32>
      %c0_9 = arith.constant 0 : index
      %c0_10 = arith.constant 0 : index
      %15 = vector.load %arg4[%c0_9, %c0_10] : memref<256x128xf32, #tpu.memory_space<vmem>>, vector<256x128xf32>
      %cst = arith.constant dense<0.000000e+00> : vector<256x128xf32>
      %16 = tpu.matmul %4, %15, %cst {dimension_numbers = #tpu.dot_dimension_numbers<[1], [0], [0], [1], [0, 0, 1, 1], [], []>} : vector<256x256xf32>, vector<256x128xf32>, vector<256x128xf32> -> vector<256x128xf32>
      %17 = arith.addf %14, %16 : vector<256x128xf32>
      %c0_11 = arith.constant 0 : index
      %c0_12 = arith.constant 0 : index
      %18 = vector.load %arg7[%c0_11, %c0_12] : memref<256x128xf32, #tpu.memory_space<vmem>>, vector<256x128xf32>
      tpu.vector_store %arg7[%c0_11, %c0_12], %17 {strides = array<i32>} : memref<256x128xf32, #tpu.memory_space<vmem>>, vector<256x128xf32>,
    } else {
    }
    %c1_i32 = arith.constant 1 : i32
    %8 = arith.cmpi eq, %arg0, %c1_i32 : i32
    %9 = arith.extui %8 : i1 to i32
    %c0_i32_4 = arith.constant 0 : i32
    %10 = arith.cmpi ne, %9, %c0_i32_4 : i32
    scf.if %10 {
      %c0_7 = arith.constant 0 : index
      %c0_8 = arith.constant 0 : index
      %14 = vector.load %arg7[%c0_7, %c0_8] : memref<256x128xf32, #tpu.memory_space<vmem>>, vector<256x128xf32>
      %15 = arith.index_cast %arg2 : i32 to index
      %c0_9 = arith.constant 0 : index
      %c0_10 = arith.constant 0 : index
      %16 = vector.load %arg8[%15, %c0_9, %c0_10] : memref<1x256x128xf32, #tpu.memory_space<vmem>>, vector<1x256x128xf32>
      %17 = vector.shape_cast %16 : vector<1x256x128xf32> to vector<256x128xf32>
      %cst = arith.constant dense<0.000000e+00> : vector<256x128xf32>
      %18 = tpu.matmul %4, %17, %cst {dimension_numbers = #tpu.dot_dimension_numbers<[1], [0], [0], [1], [0, 0, 1, 1], [], []>} : vector<256x256xf32>, vector<256x128xf32>, vector<256x128xf32> -> vector<256x128xf32>
      %19 = arith.addf %14, %18 : vector<256x128xf32>
      %c0_11 = arith.constant 0 : index
      %c0_12 = arith.constant 0 : index
      %20 = vector.load %arg7[%c0_11, %c0_12] : memref<256x128xf32, #tpu.memory_space<vmem>>, vector<256x128xf32>
      tpu.vector_store %arg7[%c0_11, %c0_12], %19 {strides = array<i32>} : memref<256x128xf32, #tpu.memory_space<vmem>>, vector<256x128xf32>,
    } else {
    }
    %c0_i32_5 = arith.constant 0 : i32
    %11 = arith.cmpi eq, %arg2, %c0_i32_5 : i32
    %12 = arith.extui %11 : i1 to i32
    %c0_i32_6 = arith.constant 0 : i32
    %13 = arith.cmpi ne, %12, %c0_i32_6 : i32
    scf.if %13 {
      %c0_7 = arith.constant 0 : index
      %c0_8 = arith.constant 0 : index
      %14 = vector.load %arg7[%c0_7, %c0_8] : memref<256x128xf32, #tpu.memory_space<vmem>>, vector<256x128xf32>
      %c0_9 = arith.constant 0 : index
      %c0_10 = arith.constant 0 : index
      %c0_11 = arith.constant 0 : index
      %15 = vector.load %arg5[%c0_9, %c0_10, %c0_11] : memref<1x128x128xf32, #tpu.memory_space<vmem>>, vector<1x128x128xf32>
      %16 = vector.shape_cast %15 : vector<1x128x128xf32> to vector<128x128xf32>
      %cst = arith.constant dense<0.000000e+00> : vector<256x128xf32>
      %17 = tpu.matmul %14, %16, %cst {dimension_numbers = #tpu.dot_dimension_numbers<[1], [0], [0], [1], [0, 0, 1, 1], [], []>} : vector<256x128xf32>, vector<128x128xf32>, vector<256x128xf32> -> vector<256x128xf32>
      %c0_12 = arith.constant 0 : index
      %c0_13 = arith.constant 0 : index
      %c0_14 = arith.constant 0 : index
      %18 = vector.load %arg6[%c0_12, %c0_13, %c0_14] : memref<1x1x128xf32, #tpu.memory_space<vmem>>, vector<1x1x128xf32>
      %19 = vector.shape_cast %18 : vector<1x1x128xf32> to vector<1x128xf32>
      %20 = vector.broadcast %19 : vector<1x128xf32> to vector<256x128xf32>
      %21 = arith.addf %17, %20 : vector<256x128xf32>
      %c0_i32_15 = arith.constant 0 : i32
      %22 = arith.cmpi eq, %arg0, %c0_i32_15 : i32
      %23 = arith.extui %22 : i1 to i32
      %c0_i32_16 = arith.constant 0 : i32
      %24 = arith.cmpi ne, %23, %c0_i32_16 : i32
      scf.if %24 {
        %cst_19 = arith.constant 0.000000e+00 : f32
        %28 = vector.broadcast %cst_19 : f32 to vector<256x128xf32>
        %29 = arith.maximumf %21, %28 : vector<256x128xf32>
        %30 = arith.index_cast %arg1 : i32 to index
        %c0_20 = arith.constant 0 : index
        %c0_21 = arith.constant 0 : index
        %31 = vector.load %arg8[%30, %c0_20, %c0_21] : memref<1x256x128xf32, #tpu.memory_space<vmem>>, vector<1x256x128xf32>
        %32 = vector.shape_cast %31 : vector<1x256x128xf32> to vector<256x128xf32>
        %33 = vector.shape_cast %29 : vector<256x128xf32> to vector<1x256x128xf32>
        tpu.vector_store %arg8[%30, %c0_20, %c0_21], %33 {strides = array<i32>} : memref<1x256x128xf32, #tpu.memory_space<vmem>>, vector<1x256x128xf32>,
      } else {
      }
      %c1_i32_17 = arith.constant 1 : i32
      %25 = arith.cmpi eq, %arg0, %c1_i32_17 : i32
      %26 = arith.extui %25 : i1 to i32
      %c0_i32_18 = arith.constant 0 : i32
      %27 = arith.cmpi ne, %26, %c0_i32_18 : i32
      scf.if %27 {
        %c0_19 = arith.constant 0 : index
        %c0_20 = arith.constant 0 : index
        %28 = vector.load %arg7[%c0_19, %c0_20] : memref<256x128xf32, #tpu.memory_space<vmem>>, vector<256x128xf32>
        tpu.vector_store %arg7[%c0_19, %c0_20], %21 {strides = array<i32>} : memref<256x128xf32, #tpu.memory_space<vmem>>, vector<256x128xf32>,
      } else {
      }
    } else {
    }
    return
  }
  func.func @transform_0(%arg0: i32, %arg1: i32, %arg2: i32) -> (i32, i32) {
    %c0_i32 = arith.constant 0 : i32
    return %arg1, %arg2 : i32, i32
  }
  func.func @transform_1(%arg0: i32, %arg1: i32, %arg2: i32) -> (i32, i32) {
    %c1_i32 = arith.constant 1 : i32
    %0 = arith.subi %c1_i32, %arg0 : i32
    %1 = arith.muli %arg2, %0 : i32
    %c0_i32 = arith.constant 0 : i32
    %c0_i32_0 = arith.constant 0 : i32
    return %1, %c0_i32 : i32, i32
  }
  func.func @transform_2(%arg0: i32, %arg1: i32, %arg2: i32) -> (i32, i32, i32) {
    %c0_i32 = arith.constant 0 : i32
    %c0_i32_0 = arith.constant 0 : i32
    %c0_i32_1 = arith.constant 0 : i32
    return %arg0, %c0_i32, %c0_i32_0 : i32, i32, i32
  }
  func.func @transform_3(%arg0: i32, %arg1: i32, %arg2: i32) -> (i32, i32, i32) {
    %c0_i32 = arith.constant 0 : i32
    %c0_i32_0 = arith.constant 0 : i32
    %c0_i32_1 = arith.constant 0 : i32
    return %arg0, %c0_i32, %c0_i32_0 : i32, i32, i32
  }
  func.func @transform_4(%arg0: i32, %arg1: i32, %arg2: i32) -> (i32, i32) {
    %0 = arith.muli %arg1, %arg0 : i32
    %c0_i32 = arith.constant 0 : i32
    %c0_i32_0 = arith.constant 0 : i32
    return %0, %c0_i32 : i32, i32
  }
}

</mosaic_0001>

<llo_original>
// kernel: net_forward.1
$region0: #{net_forward.1}
  #allocation0 [shape = 'u32[]', space=smem, size = 0x4, offset = 0x4, fixed_abs, tag = 'smem constant byte address 0x4 - core index']
  #allocation1 [shape = 'u32[144,128]{1,0:T(1,128)}', space=vmem, size = 0x12000, scoped, tag = 'internal scratch']
  #allocation2 [shape = 'f32[1,256,128]{2,1,0:T(8,128)}', space=vmem, size = 0x20000, scoped, tag = 'scratch operand']
  %s0 = inlined_call_operand.hbm [shape: s8[256,256], index: 0, kind: input, shape index: {}]
  %s1 = inlined_call_operand.hbm [shape: f32[256,128], index: 1, kind: input, shape index: {}]
  %s2 = inlined_call_operand.hbm [shape: f32[2,128,128], index: 2, kind: input, shape index: {}]
  %s3 = inlined_call_operand.vmem [shape: f32[2,1,128], index: 3, kind: input, shape index: {}]
  %s4 = inlined_call_operand.vmem [shape: f32[256,128], index: 4, kind: output, shape index: {}]
  %s5 = sld [smem:[#allocation0]]
  $region85: #{net_forward.1} parent=0
    _
  %s7 = ssub.s32 1, %s5
  %s8 = scalar_select 0, %s7, %s5
  $region1: #{net_forward.1} parent=0
    #allocation3 [shape = 'u8[65536]{0}', space=vmem, size = 0x10000, scoped, tag = 'input window, operand 0, single buffered']
    #allocation4 [shape = 's32[2]{0}', space=sflag, size = 0x8, scoped, tag = 'scoped memory for net_forward.1']
    #allocation5 [shape = 'u8[262144]{0}', space=vmem, size = 0x40000, scoped, tag = 'input window, operand 1']
    #allocation6 [shape = 's32[2]{0}', space=sflag, size = 0x8, scoped, tag = 'scoped memory for net_forward.1']
    #allocation7 [shape = 'u8[131072]{0}', space=vmem, size = 0x20000, scoped, tag = 'input window, operand 2']
    %9 = vsyncpa [#allocation4], 0
    %10 = vsyncpa [#allocation6], 0
    %s11 = scalar_lea.sflag [#allocation6], 1
    %12 = vsyncpa %s11, 0
    loop: start=0, step=1, limit=4
    $region2: #{net_forward.1} parent=1 // loop_pre_header
      _
    $region3: #{net_forward.1} parent=1 // loop_header
      %s14 = sphi 0, %s18
      %p15 = scmp.ge.s32.totalorder %s14, 4
      %s21 = sphi 0, %s40
      %s22 = sphi 0, %s36
      %s23 = sphi 0, %s32
      %s24 = sphi 0, %s21
      %s25 = sphi 0, %s22
      %s26 = sphi 0, %s23
      %s27 = sphi 0, %s24
      %s28 = sphi 0, %s25
      %s29 = sphi 0, %s26
      %s45 = sphi 0, %s47
      %s48 = sphi 0, %s45
      %s49 = sphi 0, %s48
      %s65 = sphi 0, %s49
      %s75 = sphi 0, %s77
      %s78 = sphi 0, %s75
      %s79 = sphi 0, %s78
      %s95 = sphi 0, %s79
      %s101 = sphi 0, %s103
      %s104 = sphi 0, %s101
      %s105 = sphi 0, %s104
      %s121 = sphi 0, %s105
      %s127 = sphi 0, %s129
      %s130 = sphi 0, %s127
      %s131 = sphi 0, %s130
      %s147 = sphi 0, %s131
      %s155 = sphi 0, %s157
      %s158 = sphi 0, %s155
      %s159 = sphi 0, %s158
      %s175 = sphi 0, %s159
    $region4: #{net_forward.1} parent=1 // loop_header_branch
      %17 = sbr.rel (%p15) target = $region8
    $region5: #{net_forward.1} parent=1 // loop_body
      %s19 = ssub.s32 %s14, 1
      %s20 = ssub.s32 %s14, 2
      %s30 = sadd.s32 1, %s23
      %p31 = scmp.ge.s32.totalorder %s30, 1
      %s32 = scalar_select %p31, 0, %s30
      %s33 = sadd.s32 1, %s22
      %s34 = scalar_select %p31, %s33, %s22
      %p35 = scmp.ge.s32.totalorder %s34, 1
      %s36 = scalar_select %p35, 0, %s34
      %s37 = sadd.s32 1, %s21
      %s38 = scalar_select %p35, %s37, %s21
      %p39 = scmp.ge.s32.totalorder %s38, 2
      %s40 = scalar_select %p39, 0, %s38
      %s41 = ssub.s32 %s22, %s36
      %s42 = ssub.s32 %s23, %s32
      %s43 = sor.u32 %s41, %s42
      %p44 = scmp.eq.s32.totalorder %s43, 0
      %s46 = sadd.s32 %s45, 1
      %s47 = scalar_select %p44, %s45, %s46
      %p50 = pneg %p44
      %p51 = scmp.eq.s32.totalorder %s14, 1
      %p52 = por %p50, %p51
      %p53 = scmp.ne.s32.totalorder %s45, %s48
      %p54 = scmp.eq.s32.totalorder %s14, 0
      %p55 = por %p53, %p54
      %p56 = scmp.ne.s32.totalorder %s45, %s48
      %p57 = scmp.eq.s32.totalorder %s19, 1
      %p58 = por %p56, %p57
      %p59 = scmp.ne.s32.totalorder %s48, %s49
      %p60 = scmp.eq.s32.totalorder %s19, 0
      %p61 = por %p59, %p60
      %p62 = scmp.ne.s32.totalorder %s48, %s49
      %p63 = scmp.eq.s32.totalorder %s20, 1
      %p64 = por %p62, %p63
      %p66 = scmp.ne.s32.totalorder %s49, %s65
      %p67 = scmp.eq.s32.totalorder %s20, 0
      %p68 = por %p66, %p67
      %s69 = ssub.s32 1, %s21
      %s70 = smul.u32 %s23, %s69
      %s71 = ssub.s32 1, %s40
      %s72 = smul.u32 %s32, %s71
      %s73 = ssub.s32 %s70, %s72
      %p74 = scmp.eq.s32.totalorder %s73, 0
      %s76 = sadd.s32 %s75, 1
      %s77 = scalar_select %p74, %s75, %s76
      %p80 = pneg %p74
      %p81 = scmp.eq.s32.totalorder %s14, 1
      %p82 = por %p80, %p81
      %p83 = scmp.ne.s32.totalorder %s75, %s78
      %p84 = scmp.eq.s32.totalorder %s14, 0
      %p85 = por %p83, %p84
      %p86 = scmp.ne.s32.totalorder %s75, %s78
      %p87 = scmp.eq.s32.totalorder %s19, 1
      %p88 = por %p86, %p87
      %p89 = scmp.ne.s32.totalorder %s78, %s79
      %p90 = scmp.eq.s32.totalorder %s19, 0
      %p91 = por %p89, %p90
      %p92 = scmp.ne.s32.totalorder %s78, %s79
      %p93 = scmp.eq.s32.totalorder %s20, 1
      %p94 = por %p92, %p93
      %p96 = scmp.ne.s32.totalorder %s79, %s95
      %p97 = scmp.eq.s32.totalorder %s20, 0
      %p98 = por %p96, %p97
      %s99 = ssub.s32 %s21, %s40
      %p100 = scmp.eq.s32.totalorder %s99, 0
      %s102 = sadd.s32 %s101, 1
      %s103 = scalar_select %p100, %s101, %s102
      %p106 = pneg %p100
      %p107 = scmp.eq.s32.totalorder %s14, 1
      %p108 = por %p106, %p107
      %p109 = scmp.ne.s32.totalorder %s101, %s104
      %p110 = scmp.eq.s32.totalorder %s14, 0
      %p111 = por %p109, %p110
      %p112 = scmp.ne.s32.totalorder %s101, %s104
      %p113 = scmp.eq.s32.totalorder %s19, 1
      %p114 = por %p112, %p113
      %p115 = scmp.ne.s32.totalorder %s104, %s105
      %p116 = scmp.eq.s32.totalorder %s19, 0
      %p117 = por %p115, %p116
      %p118 = scmp.ne.s32.totalorder %s104, %s105
      %p119 = scmp.eq.s32.totalorder %s20, 1
      %p120 = por %p118, %p119
      %p122 = scmp.ne.s32.totalorder %s105, %s121
      %p123 = scmp.eq.s32.totalorder %s20, 0
      %p124 = por %p122, %p123
      %s125 = ssub.s32 %s21, %s40
      %p126 = scmp.eq.s32.totalorder %s125, 0
      %s128 = sadd.s32 %s127, 1
      %s129 = scalar_select %p126, %s127, %s128
      %p132 = pneg %p126
      %p133 = scmp.eq.s32.totalorder %s14, 1
      %p134 = por %p132, %p133
      %p135 = scmp.ne.s32.totalorder %s127, %s130
      %p136 = scmp.eq.s32.totalorder %s14, 0
      %p137 = por %p135, %p136
      %p138 = scmp.ne.s32.totalorder %s127, %s130
      %p139 = scmp.eq.s32.totalorder %s19, 1
      %p140 = por %p138, %p139
      %p141 = scmp.ne.s32.totalorder %s130, %s131
      %p142 = scmp.eq.s32.totalorder %s19, 0
      %p143 = por %p141, %p142
      %p144 = scmp.ne.s32.totalorder %s130, %s131
      %p145 = scmp.eq.s32.totalorder %s20, 1
      %p146 = por %p144, %p145
      %p148 = scmp.ne.s32.totalorder %s131, %s147
      %p149 = scmp.eq.s32.totalorder %s20, 0
      %p150 = por %p148, %p149
      %s151 = smul.u32 %s22, %s21
      %s152 = smul.u32 %s36, %s40
      %s153 = ssub.s32 %s151, %s152
      %p154 = scmp.eq.s32.totalorder %s153, 0
      %s156 = sadd.s32 %s155, 1
      %s157 = scalar_select %p154, %s155, %s156
      %p160 = pneg %p154
      %p161 = scmp.eq.s32.totalorder %s14, 1
      %p162 = por %p160, %p161
      %p163 = scmp.ne.s32.totalorder %s155, %s158
      %p164 = scmp.eq.s32.totalorder %s14, 0
      %p165 = por %p163, %p164
      %p166 = scmp.ne.s32.totalorder %s155, %s158
      %p167 = scmp.eq.s32.totalorder %s19, 1
      %p168 = por %p166, %p167
      %p169 = scmp.ne.s32.totalorder %s158, %s159
      %p170 = scmp.eq.s32.totalorder %s19, 0
      %p171 = por %p169, %p170
      %p172 = scmp.ne.s32.totalorder %s158, %s159
      %p173 = scmp.eq.s32.totalorder %s20, 1
      %p174 = por %p172, %p173
      %p176 = scmp.ne.s32.totalorder %s159, %s175
      %p177 = scmp.eq.s32.totalorder %s20, 0
      %p178 = por %p176, %p177
      %p179 = scmp.le.s32.totalorder 1, %s14
      %p180 = scmp.lt.s32.totalorder %s14, 3
      %p181 = pnand %p179, %p180
      %p182 = pneg %p181
      // Predicated region
      $region9: #{net_forward.1} parent=5 // pred_check
        _
      $region10: #{net_forward.1} parent=5 // pred_check_branch
        %184 = sbr.rel (%p181) target = $region12
      $region11: #{net_forward.1} parent=5 // pred_region
        %s185 = ssub.s32 %s14, 1
        // Predicated region
        $region13: #{net_forward.1} parent=11 // pred_check
          %p186 = pneg %p61
        $region14: #{net_forward.1} parent=11 // pred_check_branch
          %188 = sbr.rel (%p186) target = $region16
        $region15: #{net_forward.1} parent=11 // pred_region
          %s189 = smul.u32 8, %s25
          %s190 = smul.u32 2, %s26
          %s192 = ssub.s32 2048, 2048
          %193 = vsyncadd [#allocation4], %s192
          %s194 = smul.addr %s189, 2
          %s195 = sadd.s32 %s190, %s194
          %s196 = smul.addr %s195, 128
          %s197 = scalar_lea.hbm %s0, %s196
          %s198 = sshll.u32 [#allocation3], 4
          %s199 = int_to_ptr.vmem [resolvable:$true] %s198
          %204 = dma.hbm_to_vmem [thread:$0]  %s197, 2048, %s199, [#allocation4], 256, 256, 16
        $region16: #{net_forward.1} parent=11 // pred_fallthru
          _
      $region12: #{net_forward.1} parent=5 // pred_fallthru
        _
      %p205 = scmp.lt.s32.totalorder %s14, 2
      // Predicated region
      $region17: #{net_forward.1} parent=5 // pred_check
        %p206 = pneg %p205
      $region18: #{net_forward.1} parent=5 // pred_check_branch
        %208 = sbr.rel (%p206) target = $region20
      $region19: #{net_forward.1} parent=5 // pred_region
        // Predicated region
        $region21: #{net_forward.1} parent=19 // pred_check
          %p209 = pneg %p85
        $region22: #{net_forward.1} parent=19 // pred_check_branch
          %211 = sbr.rel (%p209) target = $region24
        $region23: #{net_forward.1} parent=19 // pred_region
          %s212 = sand.u32 %s14, 1
          %s213 = scalar_lea.sflag [#allocation6], %s212
          %s214 = sand.u32 %s75, 1
          %s215 = smul.addr %s214, 256
          %s216 = scalar_lea.vmem [#allocation5], %s215
          %s217 = ssub.s32 1, %s21
          %s218 = smul.u32 %s23, %s217
          %s219 = smul.u32 32, %s218
          %s221 = ssub.s32 4096, 4096
          %222 = vsyncadd %s213, %s221
          %s223 = smul.addr %s219, 128
          %s224 = scalar_lea.hbm %s1, %s223
          %s225 = sshll.u32 %s216, 4
          %s226 = int_to_ptr.vmem [resolvable:$true] %s225
          %231 = dma.hbm_to_vmem [thread:$0]  %s224, 4096, %s226, %s213, 128, 128, 8
        $region24: #{net_forward.1} parent=19 // pred_fallthru
          _
        // Predicated region
        $region25: #{net_forward.1} parent=19 // pred_check
          %p232 = pneg %p111
        $region26: #{net_forward.1} parent=19 // pred_check_branch
          %234 = sbr.rel (%p232) target = $region28
        $region27: #{net_forward.1} parent=19 // pred_region
          %s235 = sand.u32 %s14, 1
          %s236 = scalar_lea.sflag [#allocation6], %s235
          %s237 = sand.u32 %s101, 1
          %s238 = smul.addr %s237, 128
          %s239 = scalar_lea.vmem [#allocation7], %s238
          %s241 = ssub.s32 2048, 2048
          %242 = vsyncadd %s236, %s241
          %s243 = smul.addr %s21, 16
          %s244 = smul.addr %s243, 128
          %s245 = scalar_lea.hbm %s2, %s244
          %s246 = sshll.u32 %s239, 4
          %s247 = int_to_ptr.vmem [resolvable:$true] %s246
          %252 = dma.hbm_to_vmem [thread:$0]  %s245, 2048, %s247, %s236, 128, 128, 8
        $region28: #{net_forward.1} parent=19 // pred_fallthru
          _
        // Predicated region
        $region29: #{net_forward.1} parent=19 // pred_check
          %p253 = pneg %p137
        $region30: #{net_forward.1} parent=19 // pred_check_branch
          %255 = sbr.rel (%p253) target = $region32
        $region31: #{net_forward.1} parent=19 // pred_region
          %p256 = scmp.lt.s32.totalorder %s21, 1
          %s257 = scalar_select %p256, %s21, 1
          %s258 = scalar_lea.vmem %s3, %s257
        $region32: #{net_forward.1} parent=19 // pred_fallthru
          _
      $region20: #{net_forward.1} parent=5 // pred_fallthru
        _
      %p259 = scmp.le.s32.totalorder 1, %s14
      %p260 = scmp.lt.s32.totalorder %s14, 3
      %p261 = pnand %p259, %p260
      %p262 = pneg %p261
      // Predicated region
      $region33: #{net_forward.1} parent=5 // pred_check
        _
      $region34: #{net_forward.1} parent=5 // pred_check_branch
        %264 = sbr.rel (%p261) target = $region36
      $region35: #{net_forward.1} parent=5 // pred_region
        %s265 = ssub.s32 %s14, 1
        // Predicated region
        $region37: #{net_forward.1} parent=35 // pred_check
          %p266 = pneg %p61
        $region38: #{net_forward.1} parent=35 // pred_check_branch
          %268 = sbr.rel (%p266) target = $region40
        $region39: #{net_forward.1} parent=35 // pred_region
          %269 = dma.done [#allocation4], 2048
        $region40: #{net_forward.1} parent=35 // pred_fallthru
          _
        %s270 = sand.u32 %s19, 1
        %s271 = scalar_lea.sflag [#allocation6], %s270
        %s272 = sand.u32 %s78, 1
        %s273 = smul.addr %s272, 256
        %s274 = scalar_lea.vmem [#allocation5], %s273
        // Predicated region
        $region41: #{net_forward.1} parent=35 // pred_check
          %p275 = pneg %p91
        $region42: #{net_forward.1} parent=35 // pred_check_branch
          %277 = sbr.rel (%p275) target = $region44
        $region43: #{net_forward.1} parent=35 // pred_region
          %278 = dma.done %s271, 4096
        $region44: #{net_forward.1} parent=35 // pred_fallthru
          _
        %s279 = sand.u32 %s19, 1
        %s280 = scalar_lea.sflag [#allocation6], %s279
        %s281 = sand.u32 %s104, 1
        %s282 = smul.addr %s281, 128
        %s283 = scalar_lea.vmem [#allocation7], %s282
        // Predicated region
        $region45: #{net_forward.1} parent=35 // pred_check
          %p284 = pneg %p117
        $region46: #{net_forward.1} parent=35 // pred_check_branch
          %286 = sbr.rel (%p284) target = $region48
        $region47: #{net_forward.1} parent=35 // pred_region
          %287 = dma.done %s280, 2048
        $region48: #{net_forward.1} parent=35 // pred_fallthru
          _
        %p288 = pneg %p61
        %p289 = pneg %p58
        %s290 = sand.u32 %s19, 1
        %s291 = scalar_lea.sflag [#allocation6], %s290
        %s292 = sand.u32 %s78, 1
        %s293 = smul.addr %s292, 256
        %s294 = scalar_lea.vmem [#allocation5], %s293
        %p295 = pneg %p91
        %p296 = pneg %p88
        %s297 = sand.u32 %s19, 1
        %s298 = scalar_lea.sflag [#allocation6], %s297
        %s299 = sand.u32 %s104, 1
        %s300 = smul.addr %s299, 128
        %s301 = scalar_lea.vmem [#allocation7], %s300
        %p302 = pneg %p117
        %p303 = pneg %p114
        %p304 = scmp.lt.s32.totalorder %s24, 1
        %s305 = scalar_select %p304, %s24, 1
        %s306 = scalar_lea.vmem %s3, %s305
        %p307 = pneg %p143
        %p308 = pneg %p140
        %p309 = pneg %p171
        %p310 = pneg %p168
        %s311 = smul.u32 %s25, %s24
        %s312 = smul.u32 32, %s311
        %p313 = scmp.lt.s32.totalorder %s312, 31
        %s314 = scalar_select %p313, %s312, 31
        %s315 = smul.addr %s314, 8
        %s316 = scalar_lea.vmem %s4, %s315
        %s317 = smul.u32 8, %s25
        %s318 = smul.u32 2, %s26
        %s319 = ssub.s32 1, %s24
        %s320 = smul.u32 %s26, %s319
        %s321 = smul.u32 32, %s320
        %p322 = scmp.lt.s32.totalorder %s24, 1
        %s323 = scalar_select %p322, %s24, 1
        %s324 = scalar_lea.vmem %s3, %s323
        %s325 = smul.u32 %s25, %s24
        %s326 = smul.u32 32, %s325
        %p327 = scmp.lt.s32.totalorder %s326, 31
        %s328 = scalar_select %p327, %s326, 31
        %s329 = smul.addr %s328, 8
        %s330 = scalar_lea.vmem %s4, %s329
        %s331 = smul.u32 %s25, %s24
        %s332 = smul.u32 32, %s331
        %p333 = scmp.eq.s32.totalorder %s26, 0
        // Predicated region
        $region49: #{net_forward.1} parent=35 // pred_check
          %p334 = pneg %p333
        $region50: #{net_forward.1} parent=35 // pred_check_branch
          %336 = sbr.rel (%p334) target = $region52
        $region51: #{net_forward.1} parent=35 // pred_region
          %337 = vst [vmem:[%s330] sm:$0xff] 0.0
          %338 = vst [vmem:[%s330 + $0x8] sm:$0xff] 0.0
          %339 = vst [vmem:[%s330 + $0x10] sm:$0xff] 0.0
          %340 = vst [vmem:[%s330 + $0x18] sm:$0xff] 0.0
          %341 = vst [vmem:[%s330 + $0x20] sm:$0xff] 0.0
          %342 = vst [vmem:[%s330 + $0x28] sm:$0xff] 0.0
          %343 = vst [vmem:[%s330 + $0x30] sm:$0xff] 0.0
          %344 = vst [vmem:[%s330 + $0x38] sm:$0xff] 0.0
          %345 = vst [vmem:[%s330 + $0x40] sm:$0xff] 0.0
          %346 = vst [vmem:[%s330 + $0x48] sm:$0xff] 0.0
          %347 = vst [vmem:[%s330 + $0x50] sm:$0xff] 0.0
          %348 = vst [vmem:[%s330 + $0x58] sm:$0xff] 0.0
          %349 = vst [vmem:[%s330 + $0x60] sm:$0xff] 0.0
          %350 = vst [vmem:[%s330 + $0x68] sm:$0xff] 0.0
          %351 = vst [vmem:[%s330 + $0x70] sm:$0xff] 0.0
          %352 = vst [vmem:[%s330 + $0x78] sm:$0xff] 0.0
          %353 = vst [vmem:[%s330 + $0x80] sm:$0xff] 0.0
          %354 = vst [vmem:[%s330 + $0x88] sm:$0xff] 0.0
          %355 = vst [vmem:[%s330 + $0x90] sm:$0xff] 0.0
          %356 = vst [vmem:[%s330 + $0x98] sm:$0xff] 0.0
          %357 = vst [vmem:[%s330 + $0xa0] sm:$0xff] 0.0
          %358 = vst [vmem:[%s330 + $0xa8] sm:$0xff] 0.0
          %359 = vst [vmem:[%s330 + $0xb0] sm:$0xff] 0.0
          %360 = vst [vmem:[%s330 + $0xb8] sm:$0xff] 0.0
          %361 = vst [vmem:[%s330 + $0xc0] sm:$0xff] 0.0
          %362 = vst [vmem:[%s330 + $0xc8] sm:$0xff] 0.0
          %363 = vst [vmem:[%s330 + $0xd0] sm:$0xff] 0.0
          %364 = vst [vmem:[%s330 + $0xd8] sm:$0xff] 0.0
          %365 = vst [vmem:[%s330 + $0xe0] sm:$0xff] 0.0
          %366 = vst [vmem:[%s330 + $0xe8] sm:$0xff] 0.0
          %367 = vst [vmem:[%s330 + $0xf0] sm:$0xff] 0.0
          %368 = vst [vmem:[%s330 + $0xf8] sm:$0xff] 0.0
        $region52: #{net_forward.1} parent=35 // pred_fallthru
          _
        %v369 = vld [vmem:[#allocation3] sm:$0xff]
        %v370 = vld [vmem:[#allocation3 + $0x8] sm:$0xff]
        %v371 = vld [vmem:[#allocation3 + $0x10] sm:$0xff]
        %v372 = vld [vmem:[#allocation3 + $0x18] sm:$0xff]
        %v373 = vld [vmem:[#allocation3 + $0x20] sm:$0xff]
        %v374 = vld [vmem:[#allocation3 + $0x28] sm:$0xff]
        %v375 = vld [vmem:[#allocation3 + $0x30] sm:$0xff]
        %v376 = vld [vmem:[#allocation3 + $0x38] sm:$0xff]
        %v377 = vld [vmem:[#allocation3 + $0x40] sm:$0xff]
        %v378 = vld [vmem:[#allocation3 + $0x48] sm:$0xff]
        %v379 = vld [vmem:[#allocation3 + $0x50] sm:$0xff]
        %v380 = vld [vmem:[#allocation3 + $0x58] sm:$0xff]
        %v381 = vld [vmem:[#allocation3 + $0x60] sm:$0xff]
        %v382 = vld [vmem:[#allocation3 + $0x68] sm:$0xff]
        %v383 = vld [vmem:[#allocation3 + $0x70] sm:$0xff]
        %v384 = vld [vmem:[#allocation3 + $0x78] sm:$0xff]
        %v385 = vunpack.c.0.s8 %v369
        %v386 = vunpack.c.0.s8 %v370
        %v387 = vunpack.c.1.s8 %v369
        %v388 = vunpack.c.1.s8 %v370
        %v389 = vunpack.c.2.s8 %v369
        %v390 = vunpack.c.2.s8 %v370
        %v391 = vunpack.c.3.s8 %v369
        %v392 = vunpack.c.3.s8 %v370
        %v393 = vunpack.c.0.s8 %v371
        %v394 = vunpack.c.0.s8 %v372
        %v395 = vunpack.c.1.s8 %v371
        %v396 = vunpack.c.1.s8 %v372
        %v397 = vunpack.c.2.s8 %v371
        %v398 = vunpack.c.2.s8 %v372
        %v399 = vunpack.c.3.s8 %v371
        %v400 = vunpack.c.3.s8 %v372
        %v401 = vunpack.c.0.s8 %v373
        %v402 = vunpack.c.0.s8 %v374
        %v403 = vunpack.c.1.s8 %v373
        %v404 = vunpack.c.1.s8 %v374
        %v405 = vunpack.c.2.s8 %v373
        %v406 = vunpack.c.2.s8 %v374
        %v407 = vunpack.c.3.s8 %v373
        %v408 = vunpack.c.3.s8 %v374
        %v409 = vunpack.c.0.s8 %v375
        %v410 = vunpack.c.0.s8 %v376
        %v411 = vunpack.c.1.s8 %v375
        %v412 = vunpack.c.1.s8 %v376
        %v413 = vunpack.c.2.s8 %v375
        %v414 = vunpack.c.2.s8 %v376
        %v415 = vunpack.c.3.s8 %v375
        %v416 = vunpack.c.3.s8 %v376
        %v417 = vunpack.c.0.s8 %v377
        %v418 = vunpack.c.0.s8 %v378
        %v419 = vunpack.c.1.s8 %v377
        %v420 = vunpack.c.1.s8 %v378
        %v421 = vunpack.c.2.s8 %v377
        %v422 = vunpack.c.2.s8 %v378
        %v423 = vunpack.c.3.s8 %v377
        %v424 = vunpack.c.3.s8 %v378
        %v425 = vunpack.c.0.s8 %v379
        %v426 = vunpack.c.0.s8 %v380
        %v427 = vunpack.c.1.s8 %v379
        %v428 = vunpack.c.1.s8 %v380
        %v429 = vunpack.c.2.s8 %v379
        %v430 = vunpack.c.2.s8 %v380
        %v431 = vunpack.c.3.s8 %v379
        %v432 = vunpack.c.3.s8 %v380
        %v433 = vunpack.c.0.s8 %v381
        %v434 = vunpack.c.0.s8 %v382
        %v435 = vunpack.c.1.s8 %v381
        %v436 = vunpack.c.1.s8 %v382
        %v437 = vunpack.c.2.s8 %v381
        %v438 = vunpack.c.2.s8 %v382
        %v439 = vunpack.c.3.s8 %v381
        %v440 = vunpack.c.3.s8 %v382
        %v441 = vunpack.c.0.s8 %v383
        %v442 = vunpack.c.0.s8 %v384
        %v443 = vunpack.c.1.s8 %v383
        %v444 = vunpack.c.1.s8 %v384
        %v445 = vunpack.c.2.s8 %v383
        %v446 = vunpack.c.2.s8 %v384
        %v447 = vunpack.c.3.s8 %v383
        %v448 = vunpack.c.3.s8 %v384
        %v449 = vcvt.s32.f32 %v385
        %v450 = vcvt.s32.f32 %v386
        %v451 = vcvt.s32.f32 %v387
        %v452 = vcvt.s32.f32 %v388
        %v453 = vcvt.s32.f32 %v389
        %v454 = vcvt.s32.f32 %v390
        %v455 = vcvt.s32.f32 %v391
        %v456 = vcvt.s32.f32 %v392
        %v457 = vcvt.s32.f32 %v393
        %v458 = vcvt.s32.f32 %v394
        %v459 = vcvt.s32.f32 %v395
        %v460 = vcvt.s32.f32 %v396
        %v461 = vcvt.s32.f32 %v397
        %v462 = vcvt.s32.f32 %v398
        %v463 = vcvt.s32.f32 %v399
        %v464 = vcvt.s32.f32 %v400
        %v465 = vcvt.s32.f32 %v401
        %v466 = vcvt.s32.f32 %v402
        %v467 = vcvt.s32.f32 %v403
        %v468 = vcvt.s32.f32 %v404
        %v469 = vcvt.s32.f32 %v405
        %v470 = vcvt.s32.f32 %v406
        %v471 = vcvt.s32.f32 %v407
        %v472 = vcvt.s32.f32 %v408
        %v473 = vcvt.s32.f32 %v409
        %v474 = vcvt.s32.f32 %v410
        %v475 = vcvt.s32.f32 %v411
        %v476 = vcvt.s32.f32 %v412
        %v477 = vcvt.s32.f32 %v413
        %v478 = vcvt.s32.f32 %v414
        %v479 = vcvt.s32.f32 %v415
        %v480 = vcvt.s32.f32 %v416
        %v481 = vcvt.s32.f32 %v417
        %v482 = vcvt.s32.f32 %v418
        %v483 = vcvt.s32.f32 %v419
        %v484 = vcvt.s32.f32 %v420
        %v485 = vcvt.s32.f32 %v421
        %v486 = vcvt.s32.f32 %v422
        %v487 = vcvt.s32.f32 %v423
        %v488 = vcvt.s32.f32 %v424
        %v489 = vcvt.s32.f32 %v425
        %v490 = vcvt.s32.f32 %v426
        %v491 = vcvt.s32.f32 %v427
        %v492 = vcvt.s32.f32 %v428
        %v493 = vcvt.s32.f32 %v429
        %v494 = vcvt.s32.f32 %v430
        %v495 = vcvt.s32.f32 %v431
        %v496 = vcvt.s32.f32 %v432
        %v497 = vcvt.s32.f32 %v433
        %v498 = vcvt.s32.f32 %v434
        %v499 = vcvt.s32.f32 %v435
        %v500 = vcvt.s32.f32 %v436
        %v501 = vcvt.s32.f32 %v437
        %v502 = vcvt.s32.f32 %v438
        %v503 = vcvt.s32.f32 %v439
        %v504 = vcvt.s32.f32 %v440
        %v505 = vcvt.s32.f32 %v441
        %v506 = vcvt.s32.f32 %v442
        %v507 = vcvt.s32.f32 %v443
        %v508 = vcvt.s32.f32 %v444
        %v509 = vcvt.s32.f32 %v445
        %v510 = vcvt.s32.f32 %v446
        %v511 = vcvt.s32.f32 %v447
        %v512 = vcvt.s32.f32 %v448
        %p513 = scmp.eq.s32.totalorder %s24, 0
        // Predicated region
        $region53: #{net_forward.1} parent=35 // pred_check
          %p514 = pneg %p513
        $region54: #{net_forward.1} parent=35 // pred_check_branch
          %516 = sbr.rel (%p514) target = $region56
        $region55: #{net_forward.1} parent=35 // pred_region
          %v517 = vld [vmem:[%s330] sm:$0xff]
          %v518 = vld [vmem:[%s330 + $0x8] sm:$0xff]
          %v519 = vld [vmem:[%s330 + $0x10] sm:$0xff]
          %v520 = vld [vmem:[%s330 + $0x18] sm:$0xff]
          %v521 = vld [vmem:[%s330 + $0x20] sm:$0xff]
          %v522 = vld [vmem:[%s330 + $0x28] sm:$0xff]
          %v523 = vld [vmem:[%s330 + $0x30] sm:$0xff]
          %v524 = vld [vmem:[%s330 + $0x38] sm:$0xff]
          %v525 = vld [vmem:[%s330 + $0x40] sm:$0xff]
          %v526 = vld [vmem:[%s330 + $0x48] sm:$0xff]
          %v527 = vld [vmem:[%s330 + $0x50] sm:$0xff]
          %v528 = vld [vmem:[%s330 + $0x58] sm:$0xff]
          %v529 = vld [vmem:[%s330 + $0x60] sm:$0xff]
          %v530 = vld [vmem:[%s330 + $0x68] sm:$0xff]
          %v531 = vld [vmem:[%s330 + $0x70] sm:$0xff]
          %v532 = vld [vmem:[%s330 + $0x78] sm:$0xff]
          %v533 = vld [vmem:[%s330 + $0x80] sm:$0xff]
          %v534 = vld [vmem:[%s330 + $0x88] sm:$0xff]
          %v535 = vld [vmem:[%s330 + $0x90] sm:$0xff]
          %v536 = vld [vmem:[%s330 + $0x98] sm:$0xff]
          %v537 = vld [vmem:[%s330 + $0xa0] sm:$0xff]
          %v538 = vld [vmem:[%s330 + $0xa8] sm:$0xff]
          %v539 = vld [vmem:[%s330 + $0xb0] sm:$0xff]
          %v540 = vld [vmem:[%s330 + $0xb8] sm:$0xff]
          %v541 = vld [vmem:[%s330 + $0xc0] sm:$0xff]
          %v542 = vld [vmem:[%s330 + $0xc8] sm:$0xff]
          %v543 = vld [vmem:[%s330 + $0xd0] sm:$0xff]
          %v544 = vld [vmem:[%s330 + $0xd8] sm:$0xff]
          %v545 = vld [vmem:[%s330 + $0xe0] sm:$0xff]
          %v546 = vld [vmem:[%s330 + $0xe8] sm:$0xff]
          %v547 = vld [vmem:[%s330 + $0xf0] sm:$0xff]
          %v548 = vld [vmem:[%s330 + $0xf8] sm:$0xff]
          %v549 = vld [vmem:[%s274] sm:$0xff]
          %v550 = vld [vmem:[%s274 + $0x8] sm:$0xff]
          %v551 = vld [vmem:[%s274 + $0x10] sm:$0xff]
          %v552 = vld [vmem:[%s274 + $0x18] sm:$0xff]
          %v553 = vld [vmem:[%s274 + $0x20] sm:$0xff]
          %v554 = vld [vmem:[%s274 + $0x28] sm:$0xff]
          %v555 = vld [vmem:[%s274 + $0x30] sm:$0xff]
          %v556 = vld [vmem:[%s274 + $0x38] sm:$0xff]
          %v557 = vld [vmem:[%s274 + $0x40] sm:$0xff]
          %v558 = vld [vmem:[%s274 + $0x48] sm:$0xff]
          %v559 = vld [vmem:[%s274 + $0x50] sm:$0xff]
          %v560 = vld [vmem:[%s274 + $0x58] sm:$0xff]
          %v561 = vld [vmem:[%s274 + $0x60] sm:$0xff]
          %v562 = vld [vmem:[%s274 + $0x68] sm:$0xff]
          %v563 = vld [vmem:[%s274 + $0x70] sm:$0xff]
          %v564 = vld [vmem:[%s274 + $0x78] sm:$0xff]
          %v565 = vld [vmem:[%s274 + $0x80] sm:$0xff]
          %v566 = vld [vmem:[%s274 + $0x88] sm:$0xff]
          %v567 = vld [vmem:[%s274 + $0x90] sm:$0xff]
          %v568 = vld [vmem:[%s274 + $0x98] sm:$0xff]
          %v569 = vld [vmem:[%s274 + $0xa0] sm:$0xff]
          %v570 = vld [vmem:[%s274 + $0xa8] sm:$0xff]
          %v571 = vld [vmem:[%s274 + $0xb0] sm:$0xff]
          %v572 = vld [vmem:[%s274 + $0xb8] sm:$0xff]
          %v573 = vld [vmem:[%s274 + $0xc0] sm:$0xff]
          %v574 = vld [vmem:[%s274 + $0xc8] sm:$0xff]
          %v575 = vld [vmem:[%s274 + $0xd0] sm:$0xff]
          %v576 = vld [vmem:[%s274 + $0xd8] sm:$0xff]
          %v577 = vld [vmem:[%s274 + $0xe0] sm:$0xff]
          %v578 = vld [vmem:[%s274 + $0xe8] sm:$0xff]
          %v579 = vld [vmem:[%s274 + $0xf0] sm:$0xff]
          %v580 = vld [vmem:[%s274 + $0xf8] sm:$0xff]
          %581 = vmatprep.subr.mxu0 0.0
          %582 = vmatpush1.msra.mxu0 %v549
          %583 = vmatprep.subr.mxu0 0.0
          %584 = vmatpush1.msra.mxu0 %v550
          %585 = vmatprep.subr.mxu0 0.0
          %586 = vmatpush1.msra.mxu0 %v551
          %587 = vmatprep.subr.mxu0 0.0
          %588 = vmatpush1.msra.mxu0 %v552
          %589 = vmatprep.subr.mxu0 0.0
          %590 = vmatpush1.msra.mxu0 %v553
          %591 = vmatprep.subr.mxu0 0.0
          %592 = vmatpush1.msra.mxu0 %v554
          %593 = vmatprep.subr.mxu0 0.0
          %594 = vmatpush1.msra.mxu0 %v555
          %595 = vmatprep.subr.mxu0 0.0
          %596 = vmatpush1.msra.mxu0 %v556
          %597 = vmatprep.subr.mxu0 0.0
          %598 = vmatpush1.msra.mxu0 %v557
          %599 = vmatprep.subr.mxu0 0.0
          %600 = vmatpush1.msra.mxu0 %v558
          %601 = vmatprep.subr.mxu0 0.0
          %602 = vmatpush1.msra.mxu0 %v559
          %603 = vmatprep.subr.mxu0 0.0
          %604 = vmatpush1.msra.mxu0 %v560
          %605 = vmatprep.subr.mxu0 0.0
          %606 = vmatpush1.msra.mxu0 %v561
          %607 = vmatprep.subr.mxu0 0.0
          %608 = vmatpush1.msra.mxu0 %v562
          %609 = vmatprep.subr.mxu0 0.0
          %610 = vmatpush1.msra.mxu0 %v563
          %611 = vmatprep.subr.mxu0 0.0
          %612 = vmatpush1.msra.mxu0 %v564
          %613 = vmatprep.subr.mxu0 0.0
          %614 = vmatpush1.msra.mxu0 %v565
          %615 = vmatprep.subr.mxu0 0.0
          %616 = vmatpush1.msra.mxu0 %v566
          %617 = vmatprep.subr.mxu0 0.0
          %618 = vmatpush1.msra.mxu0 %v567
          %619 = vmatprep.subr.mxu0 0.0
          %620 = vmatpush1.msra.mxu0 %v568
          %621 = vmatprep.subr.mxu0 0.0
          %622 = vmatpush1.msra.mxu0 %v569
          %623 = vmatprep.subr.mxu0 0.0
          %624 = vmatpush1.msra.mxu0 %v570
          %625 = vmatprep.subr.mxu0 0.0
          %626 = vmatpush1.msra.mxu0 %v571
          %627 = vmatprep.subr.mxu0 0.0
          %628 = vmatpush1.msra.mxu0 %v572
          %629 = vmatprep.subr.mxu0 0.0
          %630 = vmatpush1.msra.mxu0 %v573
          %631 = vmatprep.subr.mxu0 0.0
          %632 = vmatpush1.msra.mxu0 %v574
          %633 = vmatprep.subr.mxu0 0.0
          %634 = vmatpush1.msra.mxu0 %v575
          %635 = vmatprep.subr.mxu0 0.0
          %636 = vmatpush1.msra.mxu0 %v576
          %637 = vmatprep.subr.mxu0 0.0
          %638 = vmatpush1.msra.mxu0 %v577
          %639 = vmatprep.subr.mxu0 0.0
          %640 = vmatpush1.msra.mxu0 %v578
          %641 = vmatprep.subr.mxu0 0.0
          %642 = vmatpush1.msra.mxu0 %v579
          %643 = vmatprep.subr.mxu0 0.0
          %644 = vmatpush1.msra.mxu0 %v580
          %645 = vmatprep.mubr.f32.mxu0 %v450
          %646 = vmatmul.mubr.f32.gmra.mrb[0].mxu0 %v449
          %v647 = vpop.f32.mrb[0].mxu0
          %v648 = vadd.f32 0.0, %v647
          %v649 = vpop.f32.mrb[0].mxu0
          %650 = vmatprep.mubr.f32.mxu0 %v452
          %651 = vmatmul.mubr.f32.gmra.mrb[0].mxu0 %v451
          %v652 = vpop.f32.mrb[0].mxu0
          %v653 = vadd.f32 0.0, %v652
          %v654 = vpop.f32.mrb[0].mxu0
          %655 = vmatprep.mubr.f32.mxu0 %v454
          %656 = vmatmul.mubr.f32.gmra.mrb[0].mxu0 %v453
          %v657 = vpop.f32.mrb[0].mxu0
          %v658 = vadd.f32 0.0, %v657
          %v659 = vpop.f32.mrb[0].mxu0
          %660 = vmatprep.mubr.f32.mxu0 %v456
          %661 = vmatmul.mubr.f32.gmra.mrb[0].mxu0 %v455
          %v662 = vpop.f32.mrb[0].mxu0
          %v663 = vadd.f32 0.0, %v662
          %v664 = vpop.f32.mrb[0].mxu0
          %665 = vmatprep.mubr.f32.mxu0 %v458
          %666 = vmatmul.mubr.f32.gmra.mrb[0].mxu0 %v457
          %v667 = vpop.f32.mrb[0].mxu0
          %v668 = vadd.f32 0.0, %v667
          %v669 = vpop.f32.mrb[0].mxu0
          %670 = vmatprep.mubr.f32.mxu0 %v460
          %671 = vmatmul.mubr.f32.gmra.mrb[0].mxu0 %v459
          %v672 = vpop.f32.mrb[0].mxu0
          %v673 = vadd.f32 0.0, %v672
          %v674 = vpop.f32.mrb[0].mxu0
          %675 = vmatprep.mubr.f32.mxu0 %v462
          %676 = vmatmul.mubr.f32.gmra.mrb[0].mxu0 %v461
          %v677 = vpop.f32.mrb[0].mxu0
          %v678 = vadd.f32 0.0, %v677
          %v679 = vpop.f32.mrb[0].mxu0
          %680 = vmatprep.mubr.f32.mxu0 %v464
          %681 = vmatmul.mubr.f32.gmra.mrb[0].mxu0 %v463
          %v682 = vpop.f32.mrb[0].mxu0
          %v683 = vadd.f32 0.0, %v682
          %v684 = vpop.f32.mrb[0].mxu0
          %685 = vmatprep.mubr.f32.mxu0 %v466
          %686 = vmatmul.mubr.f32.gmra.mrb[0].mxu0 %v465
          %v687 = vpop.f32.mrb[0].mxu0
          %v688 = vadd.f32 0.0, %v687
          %v689 = vpop.f32.mrb[0].mxu0
          %690 = vmatprep.mubr.f32.mxu0 %v468
          %691 = vmatmul.mubr.f32.gmra.mrb[0].mxu0 %v467
          %v692 = vpop.f32.mrb[0].mxu0
          %v693 = vadd.f32 0.0, %v692
          %v694 = vpop.f32.mrb[0].mxu0
          %695 = vmatprep.mubr.f32.mxu0 %v470
          %696 = vmatmul.mubr.f32.gmra.mrb[0].mxu0 %v469
          %v697 = vpop.f32.mrb[0].mxu0
          %v698 = vadd.f32 0.0, %v697
          %v699 = vpop.f32.mrb[0].mxu0
          %700 = vmatprep.mubr.f32.mxu0 %v472
          %701 = vmatmul.mubr.f32.gmra.mrb[0].mxu0 %v471
          %v702 = vpop.f32.mrb[0].mxu0
          %v703 = vadd.f32 0.0, %v702
          %v704 = vpop.f32.mrb[0].mxu0
          %705 = vmatprep.mubr.f32.mxu0 %v474
          %706 = vmatmul.mubr.f32.gmra.mrb[0].mxu0 %v473
          %v707 = vpop.f32.mrb[0].mxu0
          %v708 = vadd.f32 0.0, %v707
          %v709 = vpop.f32.mrb[0].mxu0
          %710 = vmatprep.mubr.f32.mxu0 %v476
          %711 = vmatmul.mubr.f32.gmra.mrb[0].mxu0 %v475
          %v712 = vpop.f32.mrb[0].mxu0
          %v713 = vadd.f32 0.0, %v712
          %v714 = vpop.f32.mrb[0].mxu0
          %715 = vmatprep.mubr.f32.mxu0 %v478
          %716 = vmatmul.mubr.f32.gmra.mrb[0].mxu0 %v477
          %v717 = vpop.f32.mrb[0].mxu0
          %v718 = vadd.f32 0.0, %v717
          %v719 = vpop.f32.mrb[0].mxu0
          %720 = vmatprep.mubr.f32.mxu0 %v480
          %721 = vmatmul.mubr.f32.gmra.mrb[0].mxu0 %v479
          %v722 = vpop.f32.mrb[0].mxu0
          %v723 = vadd.f32 0.0, %v722
          %v724 = vpop.f32.mrb[0].mxu0
          %725 = vmatprep.mubr.f32.mxu0 %v482
          %726 = vmatmul.mubr.f32.gmra.mrb[0].mxu0 %v481
          %v727 = vpop.f32.mrb[0].mxu0
          %v728 = vadd.f32 0.0, %v727
          %v729 = vpop.f32.mrb[0].mxu0
          %730 = vmatprep.mubr.f32.mxu0 %v484
          %731 = vmatmul.mubr.f32.gmra.mrb[0].mxu0 %v483
          %v732 = vpop.f32.mrb[0].mxu0
          %v733 = vadd.f32 0.0, %v732
          %v734 = vpop.f32.mrb[0].mxu0
          %735 = vmatprep.mubr.f32.mxu0 %v486
          %736 = vmatmul.mubr.f32.gmra.mrb[0].mxu0 %v485
          %v737 = vpop.f32.mrb[0].mxu0
          %v738 = vadd.f32 0.0, %v737
          %v739 = vpop.f32.mrb[0].mxu0
          %740 = vmatprep.mubr.f32.mxu0 %v488
          %741 = vmatmul.mubr.f32.gmra.mrb[0].mxu0 %v487
          %v742 = vpop.f32.mrb[0].mxu0
          %v743 = vadd.f32 0.0, %v742
          %v744 = vpop.f32.mrb[0].mxu0
          %745 = vmatprep.mubr.f32.mxu0 %v490
          %746 = vmatmul.mubr.f32.gmra.mrb[0].mxu0 %v489
          %v747 = vpop.f32.mrb[0].mxu0
          %v748 = vadd.f32 0.0, %v747
          %v749 = vpop.f32.mrb[0].mxu0
          %750 = vmatprep.mubr.f32.mxu0 %v492
          %751 = vmatmul.mubr.f32.gmra.mrb[0].mxu0 %v491
          %v752 = vpop.f32.mrb[0].mxu0
          %v753 = vadd.f32 0.0, %v752
          %v754 = vpop.f32.mrb[0].mxu0
          %755 = vmatprep.mubr.f32.mxu0 %v494
          %756 = vmatmul.mubr.f32.gmra.mrb[0].mxu0 %v493
          %v757 = vpop.f32.mrb[0].mxu0
          %v758 = vadd.f32 0.0, %v757
          %v759 = vpop.f32.mrb[0].mxu0
          %760 = vmatprep.mubr.f32.mxu0 %v496
          %761 = vmatmul.mubr.f32.gmra.mrb[0].mxu0 %v495
          %v762 = vpop.f32.mrb[0].mxu0
          %v763 = vadd.f32 0.0, %v762
          %v764 = vpop.f32.mrb[0].mxu0
          %765 = vmatprep.mubr.f32.mxu0 %v498
          %766 = vmatmul.mubr.f32.gmra.mrb[0].mxu0 %v497
          %v767 = vpop.f32.mrb[0].mxu0
          %v768 = vadd.f32 0.0, %v767
          %v769 = vpop.f32.mrb[0].mxu0
          %770 = vmatprep.mubr.f32.mxu0 %v500
          %771 = vmatmul.mubr.f32.gmra.mrb[0].mxu0 %v499
          %v772 = vpop.f32.mrb[0].mxu0
          %v773 = vadd.f32 0.0, %v772
          %v774 = vpop.f32.mrb[0].mxu0
          %775 = vmatprep.mubr.f32.mxu0 %v502
          %776 = vmatmul.mubr.f32.gmra.mrb[0].mxu0 %v501
          %v777 = vpop.f32.mrb[0].mxu0
          %v778 = vadd.f32 0.0, %v777
          %v779 = vpop.f32.mrb[0].mxu0
          %780 = vmatprep.mubr.f32.mxu0 %v504
          %781 = vmatmul.mubr.f32.gmra.mrb[0].mxu0 %v503
          %v782 = vpop.f32.mrb[0].mxu0
          %v783 = vadd.f32 0.0, %v782
          %v784 = vpop.f32.mrb[0].mxu0
          %785 = vmatprep.mubr.f32.mxu0 %v506
          %786 = vmatmul.mubr.f32.gmra.mrb[0].mxu0 %v505
          %v787 = vpop.f32.mrb[0].mxu0
          %v788 = vadd.f32 0.0, %v787
          %v789 = vpop.f32.mrb[0].mxu0
          %790 = vmatprep.mubr.f32.mxu0 %v508
          %791 = vmatmul.mubr.f32.gmra.mrb[0].mxu0 %v507
          %v792 = vpop.f32.mrb[0].mxu0
          %v793 = vadd.f32 0.0, %v792
          %v794 = vpop.f32.mrb[0].mxu0
          %795 = vmatprep.mubr.f32.mxu0 %v510
          %796 = vmatmul.mubr.f32.gmra.mrb[0].mxu0 %v509
          %v797 = vpop.f32.mrb[0].mxu0
          %v798 = vadd.f32 0.0, %v797
          %v799 = vpop.f32.mrb[0].mxu0
          %800 = vmatprep.mubr.f32.mxu0 %v512
          %801 = vmatmul.mubr.f32.gmra.mrb[0].mxu0 %v511
          %v802 = vpop.f32.mrb[0].mxu0
          %v803 = vadd.f32 0.0, %v802
          %v804 = vpop.f32.mrb[0].mxu0
          %805 = vdwg.mxu0
          %v806 = vadd.f32 %v517, %v648
          %v807 = vadd.f32 %v518, %v653
          %v808 = vadd.f32 %v519, %v658
          %v809 = vadd.f32 %v520, %v663
          %v810 = vadd.f32 %v521, %v668
          %v811 = vadd.f32 %v522, %v673
          %v812 = vadd.f32 %v523, %v678
          %v813 = vadd.f32 %v524, %v683
          %v814 = vadd.f32 %v525, %v688
          %v815 = vadd.f32 %v526, %v693
          %v816 = vadd.f32 %v527, %v698
          %v817 = vadd.f32 %v528, %v703
          %v818 = vadd.f32 %v529, %v708
          %v819 = vadd.f32 %v530, %v713
          %v820 = vadd.f32 %v531, %v718
          %v821 = vadd.f32 %v532, %v723
          %v822 = vadd.f32 %v533, %v728
          %v823 = vadd.f32 %v534, %v733
          %v824 = vadd.f32 %v535, %v738
          %v825 = vadd.f32 %v536, %v743
          %v826 = vadd.f32 %v537, %v748
          %v827 = vadd.f32 %v538, %v753
          %v828 = vadd.f32 %v539, %v758
          %v829 = vadd.f32 %v540, %v763
          %v830 = vadd.f32 %v541, %v768
          %v831 = vadd.f32 %v542, %v773
          %v832 = vadd.f32 %v543, %v778
          %v833 = vadd.f32 %v544, %v783
          %v834 = vadd.f32 %v545, %v788
          %v835 = vadd.f32 %v546, %v793
          %v836 = vadd.f32 %v547, %v798
          %v837 = vadd.f32 %v548, %v803
          %838 = vst [vmem:[%s330] sm:$0xff] %v806
          %839 = vst [vmem:[%s330 + $0x8] sm:$0xff] %v807
          %840 = vst [vmem:[%s330 + $0x10] sm:$0xff] %v808
          %841 = vst [vmem:[%s330 + $0x18] sm:$0xff] %v809
          %842 = vst [vmem:[%s330 + $0x20] sm:$0xff] %v810
          %843 = vst [vmem:[%s330 + $0x28] sm:$0xff] %v811
          %844 = vst [vmem:[%s330 + $0x30] sm:$0xff] %v812
          %845 = vst [vmem:[%s330 + $0x38] sm:$0xff] %v813
          %846 = vst [vmem:[%s330 + $0x40] sm:$0xff] %v814
          %847 = vst [vmem:[%s330 + $0x48] sm:$0xff] %v815
          %848 = vst [vmem:[%s330 + $0x50] sm:$0xff] %v816
          %849 = vst [vmem:[%s330 + $0x58] sm:$0xff] %v817
          %850 = vst [vmem:[%s330 + $0x60] sm:$0xff] %v818
          %851 = vst [vmem:[%s330 + $0x68] sm:$0xff] %v819
          %852 = vst [vmem:[%s330 + $0x70] sm:$0xff] %v820
          %853 = vst [vmem:[%s330 + $0x78] sm:$0xff] %v821
          %854 = vst [vmem:[%s330 + $0x80] sm:$0xff] %v822
          %855 = vst [vmem:[%s330 + $0x88] sm:$0xff] %v823
          %856 = vst [vmem:[%s330 + $0x90] sm:$0xff] %v824
          %857 = vst [vmem:[%s330 + $0x98] sm:$0xff] %v825
          %858 = vst [vmem:[%s330 + $0xa0] sm:$0xff] %v826
          %859 = vst [vmem:[%s330 + $0xa8] sm:$0xff] %v827
          %860 = vst [vmem:[%s330 + $0xb0] sm:$0xff] %v828
          %861 = vst [vmem:[%s330 + $0xb8] sm:$0xff] %v829
          %862 = vst [vmem:[%s330 + $0xc0] sm:$0xff] %v830
          %863 = vst [vmem:[%s330 + $0xc8] sm:$0xff] %v831
          %864 = vst [vmem:[%s330 + $0xd0] sm:$0xff] %v832
          %865 = vst [vmem:[%s330 + $0xd8] sm:$0xff] %v833
          %866 = vst [vmem:[%s330 + $0xe0] sm:$0xff] %v834
          %867 = vst [vmem:[%s330 + $0xe8] sm:$0xff] %v835
          %868 = vst [vmem:[%s330 + $0xf0] sm:$0xff] %v836
          %869 = vst [vmem:[%s330 + $0xf8] sm:$0xff] %v837
        $region56: #{net_forward.1} parent=35 // pred_fallthru
          _
        %p870 = scmp.eq.s32.totalorder %s24, 1
        // Predicated region
        $region57: #{net_forward.1} parent=35 // pred_check
          %p871 = pneg %p870
        $region58: #{net_forward.1} parent=35 // pred_check_branch
          %873 = sbr.rel (%p871) target = $region60
        $region59: #{net_forward.1} parent=35 // pred_region
          %v874 = vld [vmem:[%s330] sm:$0xff]
          %v875 = vld [vmem:[%s330 + $0x8] sm:$0xff]
          %v876 = vld [vmem:[%s330 + $0x10] sm:$0xff]
          %v877 = vld [vmem:[%s330 + $0x18] sm:$0xff]
          %v878 = vld [vmem:[%s330 + $0x20] sm:$0xff]
          %v879 = vld [vmem:[%s330 + $0x28] sm:$0xff]
          %v880 = vld [vmem:[%s330 + $0x30] sm:$0xff]
          %v881 = vld [vmem:[%s330 + $0x38] sm:$0xff]
          %v882 = vld [vmem:[%s330 + $0x40] sm:$0xff]
          %v883 = vld [vmem:[%s330 + $0x48] sm:$0xff]
          %v884 = vld [vmem:[%s330 + $0x50] sm:$0xff]
          %v885 = vld [vmem:[%s330 + $0x58] sm:$0xff]
          %v886 = vld [vmem:[%s330 + $0x60] sm:$0xff]
          %v887 = vld [vmem:[%s330 + $0x68] sm:$0xff]
          %v888 = vld [vmem:[%s330 + $0x70] sm:$0xff]
          %v889 = vld [vmem:[%s330 + $0x78] sm:$0xff]
          %v890 = vld [vmem:[%s330 + $0x80] sm:$0xff]
          %v891 = vld [vmem:[%s330 + $0x88] sm:$0xff]
          %v892 = vld [vmem:[%s330 + $0x90] sm:$0xff]
          %v893 = vld [vmem:[%s330 + $0x98] sm:$0xff]
          %v894 = vld [vmem:[%s330 + $0xa0] sm:$0xff]
          %v895 = vld [vmem:[%s330 + $0xa8] sm:$0xff]
          %v896 = vld [vmem:[%s330 + $0xb0] sm:$0xff]
          %v897 = vld [vmem:[%s330 + $0xb8] sm:$0xff]
          %v898 = vld [vmem:[%s330 + $0xc0] sm:$0xff]
          %v899 = vld [vmem:[%s330 + $0xc8] sm:$0xff]
          %v900 = vld [vmem:[%s330 + $0xd0] sm:$0xff]
          %v901 = vld [vmem:[%s330 + $0xd8] sm:$0xff]
          %v902 = vld [vmem:[%s330 + $0xe0] sm:$0xff]
          %v903 = vld [vmem:[%s330 + $0xe8] sm:$0xff]
          %v904 = vld [vmem:[%s330 + $0xf0] sm:$0xff]
          %v905 = vld [vmem:[%s330 + $0xf8] sm:$0xff]
          %s906 = smul.u32 %s26, 256
          %s907 = scalar_lea.vmem [#allocation2], %s906
          %v908 = vld [vmem:[%s907] sm:$0xff]
          %v909 = vld [vmem:[%s907 + $0x8] sm:$0xff]
          %v910 = vld [vmem:[%s907 + $0x10] sm:$0xff]
          %v911 = vld [vmem:[%s907 + $0x18] sm:$0xff]
          %v912 = vld [vmem:[%s907 + $0x20] sm:$0xff]
          %v913 = vld [vmem:[%s907 + $0x28] sm:$0xff]
          %v914 = vld [vmem:[%s907 + $0x30] sm:$0xff]
          %v915 = vld [vmem:[%s907 + $0x38] sm:$0xff]
          %v916 = vld [vmem:[%s907 + $0x40] sm:$0xff]
          %v917 = vld [vmem:[%s907 + $0x48] sm:$0xff]
          %v918 = vld [vmem:[%s907 + $0x50] sm:$0xff]
          %v919 = vld [vmem:[%s907 + $0x58] sm:$0xff]
          %v920 = vld [vmem:[%s907 + $0x60] sm:$0xff]
          %v921 = vld [vmem:[%s907 + $0x68] sm:$0xff]
          %v922 = vld [vmem:[%s907 + $0x70] sm:$0xff]
          %v923 = vld [vmem:[%s907 + $0x78] sm:$0xff]
          %v924 = vld [vmem:[%s907 + $0x80] sm:$0xff]
          %v925 = vld [vmem:[%s907 + $0x88] sm:$0xff]
          %v926 = vld [vmem:[%s907 + $0x90] sm:$0xff]
          %v927 = vld [vmem:[%s907 + $0x98] sm:$0xff]
          %v928 = vld [vmem:[%s907 + $0xa0] sm:$0xff]
          %v929 = vld [vmem:[%s907 + $0xa8] sm:$0xff]
          %v930 = vld [vmem:[%s907 + $0xb0] sm:$0xff]
          %v931 = vld [vmem:[%s907 + $0xb8] sm:$0xff]
          %v932 = vld [vmem:[%s907 + $0xc0] sm:$0xff]
          %v933 = vld [vmem:[%s907 + $0xc8] sm:$0xff]
          %v934 = vld [vmem:[%s907 + $0xd0] sm:$0xff]
          %v935 = vld [vmem:[%s907 + $0xd8] sm:$0xff]
          %v936 = vld [vmem:[%s907 + $0xe0] sm:$0xff]
          %v937 = vld [vmem:[%s907 + $0xe8] sm:$0xff]
          %v938 = vld [vmem:[%s907 + $0xf0] sm:$0xff]
          %v939 = vld [vmem:[%s907 + $0xf8] sm:$0xff]
          %940 = vmatprep.subr.mxu0 0.0
          %941 = vmatpush1.msra.mxu0 %v908
          %942 = vmatprep.subr.mxu0 0.0
          %943 = vmatpush1.msra.mxu0 %v909
          %944 = vmatprep.subr.mxu0 0.0
          %945 = vmatpush1.msra.mxu0 %v910
          %946 = vmatprep.subr.mxu0 0.0
          %947 = vmatpush1.msra.mxu0 %v911
          %948 = vmatprep.subr.mxu0 0.0
          %949 = vmatpush1.msra.mxu0 %v912
          %950 = vmatprep.subr.mxu0 0.0
          %951 = vmatpush1.msra.mxu0 %v913
          %952 = vmatprep.subr.mxu0 0.0
          %953 = vmatpush1.msra.mxu0 %v914
          %954 = vmatprep.subr.mxu0 0.0
          %955 = vmatpush1.msra.mxu0 %v915
          %956 = vmatprep.subr.mxu0 0.0
          %957 = vmatpush1.msra.mxu0 %v916
          %958 = vmatprep.subr.mxu0 0.0
          %959 = vmatpush1.msra.mxu0 %v917
          %960 = vmatprep.subr.mxu0 0.0
          %961 = vmatpush1.msra.mxu0 %v918
          %962 = vmatprep.subr.mxu0 0.0
          %963 = vmatpush1.msra.mxu0 %v919
          %964 = vmatprep.subr.mxu0 0.0
          %965 = vmatpush1.msra.mxu0 %v920
          %966 = vmatprep.subr.mxu0 0.0
          %967 = vmatpush1.msra.mxu0 %v921
          %968 = vmatprep.subr.mxu0 0.0
          %969 = vmatpush1.msra.mxu0 %v922
          %970 = vmatprep.subr.mxu0 0.0
          %971 = vmatpush1.msra.mxu0 %v923
          %972 = vmatprep.subr.mxu0 0.0
          %973 = vmatpush1.msra.mxu0 %v924
          %974 = vmatprep.subr.mxu0 0.0
          %975 = vmatpush1.msra.mxu0 %v925
          %976 = vmatprep.subr.mxu0 0.0
          %977 = vmatpush1.msra.mxu0 %v926
          %978 = vmatprep.subr.mxu0 0.0
          %979 = vmatpush1.msra.mxu0 %v927
          %980 = vmatprep.subr.mxu0 0.0
          %981 = vmatpush1.msra.mxu0 %v928
          %982 = vmatprep.subr.mxu0 0.0
          %983 = vmatpush1.msra.mxu0 %v929
          %984 = vmatprep.subr.mxu0 0.0
          %985 = vmatpush1.msra.mxu0 %v930
          %986 = vmatprep.subr.mxu0 0.0
          %987 = vmatpush1.msra.mxu0 %v931
          %988 = vmatprep.subr.mxu0 0.0
          %989 = vmatpush1.msra.mxu0 %v932
          %990 = vmatprep.subr.mxu0 0.0
          %991 = vmatpush1.msra.mxu0 %v933
          %992 = vmatprep.subr.mxu0 0.0
          %993 = vmatpush1.msra.mxu0 %v934
          %994 = vmatprep.subr.mxu0 0.0
          %995 = vmatpush1.msra.mxu0 %v935
          %996 = vmatprep.subr.mxu0 0.0
          %997 = vmatpush1.msra.mxu0 %v936
          %998 = vmatprep.subr.mxu0 0.0
          %999 = vmatpush1.msra.mxu0 %v937
          %1000 = vmatprep.subr.mxu0 0.0
          %1001 = vmatpush1.msra.mxu0 %v938
          %1002 = vmatprep.subr.mxu0 0.0
          %1003 = vmatpush1.msra.mxu0 %v939
          %1004 = vmatprep.mubr.f32.mxu0 %v450
          %1005 = vmatmul.mubr.f32.gmra.mrb[0].mxu0 %v449
          %v1006 = vpop.f32.mrb[0].mxu0
          %v1007 = vadd.f32 0.0, %v1006
          %v1008 = vpop.f32.mrb[0].mxu0
          %1009 = vmatprep.mubr.f32.mxu0 %v452
          %1010 = vmatmul.mubr.f32.gmra.mrb[0].mxu0 %v451
          %v1011 = vpop.f32.mrb[0].mxu0
          %v1012 = vadd.f32 0.0, %v1011
          %v1013 = vpop.f32.mrb[0].mxu0
          %1014 = vmatprep.mubr.f32.mxu0 %v454
          %1015 = vmatmul.mubr.f32.gmra.mrb[0].mxu0 %v453
          %v1016 = vpop.f32.mrb[0].mxu0
          %v1017 = vadd.f32 0.0, %v1016
          %v1018 = vpop.f32.mrb[0].mxu0
          %1019 = vmatprep.mubr.f32.mxu0 %v456
          %1020 = vmatmul.mubr.f32.gmra.mrb[0].mxu0 %v455
          %v1021 = vpop.f32.mrb[0].mxu0
          %v1022 = vadd.f32 0.0, %v1021
          %v1023 = vpop.f32.mrb[0].mxu0
          %1024 = vmatprep.mubr.f32.mxu0 %v458
          %1025 = vmatmul.mubr.f32.gmra.mrb[0].mxu0 %v457
          %v1026 = vpop.f32.mrb[0].mxu0
          %v1027 = vadd.f32 0.0, %v1026
          %v1028 = vpop.f32.mrb[0].mxu0
          %1029 = vmatprep.mubr.f32.mxu0 %v460
          %1030 = vmatmul.mubr.f32.gmra.mrb[0].mxu0 %v459
          %v1031 = vpop.f32.mrb[0].mxu0
          %v1032 = vadd.f32 0.0, %v1031
          %v1033 = vpop.f32.mrb[0].mxu0
          %1034 = vmatprep.mubr.f32.mxu0 %v462
          %1035 = vmatmul.mubr.f32.gmra.mrb[0].mxu0 %v461
          %v1036 = vpop.f32.mrb[0].mxu0
          %v1037 = vadd.f32 0.0, %v1036
          %v1038 = vpop.f32.mrb[0].mxu0
          %1039 = vmatprep.mubr.f32.mxu0 %v464
          %1040 = vmatmul.mubr.f32.gmra.mrb[0].mxu0 %v463
          %v1041 = vpop.f32.mrb[0].mxu0
          %v1042 = vadd.f32 0.0, %v1041
          %v1043 = vpop.f32.mrb[0].mxu0
          %1044 = vmatprep.mubr.f32.mxu0 %v466
          %1045 = vmatmul.mubr.f32.gmra.mrb[0].mxu0 %v465
          %v1046 = vpop.f32.mrb[0].mxu0
          %v1047 = vadd.f32 0.0, %v1046
          %v1048 = vpop.f32.mrb[0].mxu0
          %1049 = vmatprep.mubr.f32.mxu0 %v468
          %1050 = vmatmul.mubr.f32.gmra.mrb[0].mxu0 %v467
          %v1051 = vpop.f32.mrb[0].mxu0
          %v1052 = vadd.f32 0.0, %v1051
          %v1053 = vpop.f32.mrb[0].mxu0
          %1054 = vmatprep.mubr.f32.mxu0 %v470
          %1055 = vmatmul.mubr.f32.gmra.mrb[0].mxu0 %v469
          %v1056 = vpop.f32.mrb[0].mxu0
          %v1057 = vadd.f32 0.0, %v1056
          %v1058 = vpop.f32.mrb[0].mxu0
          %1059 = vmatprep.mubr.f32.mxu0 %v472
          %1060 = vmatmul.mubr.f32.gmra.mrb[0].mxu0 %v471
          %v1061 = vpop.f32.mrb[0].mxu0
          %v1062 = vadd.f32 0.0, %v1061
          %v1063 = vpop.f32.mrb[0].mxu0
          %1064 = vmatprep.mubr.f32.mxu0 %v474
          %1065 = vmatmul.mubr.f32.gmra.mrb[0].mxu0 %v473
          %v1066 = vpop.f32.mrb[0].mxu0
          %v1067 = vadd.f32 0.0, %v1066
          %v1068 = vpop.f32.mrb[0].mxu0
          %1069 = vmatprep.mubr.f32.mxu0 %v476
          %1070 = vmatmul.mubr.f32.gmra.mrb[0].mxu0 %v475
          %v1071 = vpop.f32.mrb[0].mxu0
          %v1072 = vadd.f32 0.0, %v1071
          %v1073 = vpop.f32.mrb[0].mxu0
          %1074 = vmatprep.mubr.f32.mxu0 %v478
          %1075 = vmatmul.mubr.f32.gmra.mrb[0].mxu0 %v477
          %v1076 = vpop.f32.mrb[0].mxu0
          %v1077 = vadd.f32 0.0, %v1076
          %v1078 = vpop.f32.mrb[0].mxu0
          %1079 = vmatprep.mubr.f32.mxu0 %v480
          %1080 = vmatmul.mubr.f32.gmra.mrb[0].mxu0 %v479
          %v1081 = vpop.f32.mrb[0].mxu0
          %v1082 = vadd.f32 0.0, %v1081
          %v1083 = vpop.f32.mrb[0].mxu0
          %1084 = vmatprep.mubr.f32.mxu0 %v482
          %1085 = vmatmul.mubr.f32.gmra.mrb[0].mxu0 %v481
          %v1086 = vpop.f32.mrb[0].mxu0
          %v1087 = vadd.f32 0.0, %v1086
          %v1088 = vpop.f32.mrb[0].mxu0
          %1089 = vmatprep.mubr.f32.mxu0 %v484
          %1090 = vmatmul.mubr.f32.gmra.mrb[0].mxu0 %v483
          %v1091 = vpop.f32.mrb[0].mxu0
          %v1092 = vadd.f32 0.0, %v1091
          %v1093 = vpop.f32.mrb[0].mxu0
          %1094 = vmatprep.mubr.f32.mxu0 %v486
          %1095 = vmatmul.mubr.f32.gmra.mrb[0].mxu0 %v485
          %v1096 = vpop.f32.mrb[0].mxu0
          %v1097 = vadd.f32 0.0, %v1096
          %v1098 = vpop.f32.mrb[0].mxu0
          %1099 = vmatprep.mubr.f32.mxu0 %v488
          %1100 = vmatmul.mubr.f32.gmra.mrb[0].mxu0 %v487
          %v1101 = vpop.f32.mrb[0].mxu0
          %v1102 = vadd.f32 0.0, %v1101
          %v1103 = vpop.f32.mrb[0].mxu0
          %1104 = vmatprep.mubr.f32.mxu0 %v490
          %1105 = vmatmul.mubr.f32.gmra.mrb[0].mxu0 %v489
          %v1106 = vpop.f32.mrb[0].mxu0
          %v1107 = vadd.f32 0.0, %v1106
          %v1108 = vpop.f32.mrb[0].mxu0
          %1109 = vmatprep.mubr.f32.mxu0 %v492
          %1110 = vmatmul.mubr.f32.gmra.mrb[0].mxu0 %v491
          %v1111 = vpop.f32.mrb[0].mxu0
          %v1112 = vadd.f32 0.0, %v1111
          %v1113 = vpop.f32.mrb[0].mxu0
          %1114 = vmatprep.mubr.f32.mxu0 %v494
          %1115 = vmatmul.mubr.f32.gmra.mrb[0].mxu0 %v493
          %v1116 = vpop.f32.mrb[0].mxu0
          %v1117 = vadd.f32 0.0, %v1116
          %v1118 = vpop.f32.mrb[0].mxu0
          %1119 = vmatprep.mubr.f32.mxu0 %v496
          %1120 = vmatmul.mubr.f32.gmra.mrb[0].mxu0 %v495
          %v1121 = vpop.f32.mrb[0].mxu0
          %v1122 = vadd.f32 0.0, %v1121
          %v1123 = vpop.f32.mrb[0].mxu0
          %1124 = vmatprep.mubr.f32.mxu0 %v498
          %1125 = vmatmul.mubr.f32.gmra.mrb[0].mxu0 %v497
          %v1126 = vpop.f32.mrb[0].mxu0
          %v1127 = vadd.f32 0.0, %v1126
          %v1128 = vpop.f32.mrb[0].mxu0
          %1129 = vmatprep.mubr.f32.mxu0 %v500
          %1130 = vmatmul.mubr.f32.gmra.mrb[0].mxu0 %v499
          %v1131 = vpop.f32.mrb[0].mxu0
          %v1132 = vadd.f32 0.0, %v1131
          %v1133 = vpop.f32.mrb[0].mxu0
          %1134 = vmatprep.mubr.f32.mxu0 %v502
          %1135 = vmatmul.mubr.f32.gmra.mrb[0].mxu0 %v501
          %v1136 = vpop.f32.mrb[0].mxu0
          %v1137 = vadd.f32 0.0, %v1136
          %v1138 = vpop.f32.mrb[0].mxu0
          %1139 = vmatprep.mubr.f32.mxu0 %v504
          %1140 = vmatmul.mubr.f32.gmra.mrb[0].mxu0 %v503
          %v1141 = vpop.f32.mrb[0].mxu0
          %v1142 = vadd.f32 0.0, %v1141
          %v1143 = vpop.f32.mrb[0].mxu0
          %1144 = vmatprep.mubr.f32.mxu0 %v506
          %1145 = vmatmul.mubr.f32.gmra.mrb[0].mxu0 %v505
          %v1146 = vpop.f32.mrb[0].mxu0
          %v1147 = vadd.f32 0.0, %v1146
          %v1148 = vpop.f32.mrb[0].mxu0
          %1149 = vmatprep.mubr.f32.mxu0 %v508
          %1150 = vmatmul.mubr.f32.gmra.mrb[0].mxu0 %v507
          %v1151 = vpop.f32.mrb[0].mxu0
          %v1152 = vadd.f32 0.0, %v1151
          %v1153 = vpop.f32.mrb[0].mxu0
          %1154 = vmatprep.mubr.f32.mxu0 %v510
          %1155 = vmatmul.mubr.f32.gmra.mrb[0].mxu0 %v509
          %v1156 = vpop.f32.mrb[0].mxu0
          %v1157 = vadd.f32 0.0, %v1156
          %v1158 = vpop.f32.mrb[0].mxu0
          %1159 = vmatprep.mubr.f32.mxu0 %v512
          %1160 = vmatmul.mubr.f32.gmra.mrb[0].mxu0 %v511
          %v1161 = vpop.f32.mrb[0].mxu0
          %v1162 = vadd.f32 0.0, %v1161
          %v1163 = vpop.f32.mrb[0].mxu0
          %1164 = vdwg.mxu0
          %v1165 = vadd.f32 %v874, %v1007
          %v1166 = vadd.f32 %v875, %v1012
          %v1167 = vadd.f32 %v876, %v1017
          %v1168 = vadd.f32 %v877, %v1022
          %v1169 = vadd.f32 %v878, %v1027
          %v1170 = vadd.f32 %v879, %v1032
          %v1171 = vadd.f32 %v880, %v1037
          %v1172 = vadd.f32 %v881, %v1042
          %v1173 = vadd.f32 %v882, %v1047
          %v1174 = vadd.f32 %v883, %v1052
          %v1175 = vadd.f32 %v884, %v1057
          %v1176 = vadd.f32 %v885, %v1062
          %v1177 = vadd.f32 %v886, %v1067
          %v1178 = vadd.f32 %v887, %v1072
          %v1179 = vadd.f32 %v888, %v1077
          %v1180 = vadd.f32 %v889, %v1082
          %v1181 = vadd.f32 %v890, %v1087
          %v1182 = vadd.f32 %v891, %v1092
          %v1183 = vadd.f32 %v892, %v1097
          %v1184 = vadd.f32 %v893, %v1102
          %v1185 = vadd.f32 %v894, %v1107
          %v1186 = vadd.f32 %v895, %v1112
          %v1187 = vadd.f32 %v896, %v1117
          %v1188 = vadd.f32 %v897, %v1122
          %v1189 = vadd.f32 %v898, %v1127
          %v1190 = vadd.f32 %v899, %v1132
          %v1191 = vadd.f32 %v900, %v1137
          %v1192 = vadd.f32 %v901, %v1142
          %v1193 = vadd.f32 %v902, %v1147
          %v1194 = vadd.f32 %v903, %v1152
          %v1195 = vadd.f32 %v904, %v1157
          %v1196 = vadd.f32 %v905, %v1162
          %1197 = vst [vmem:[%s330] sm:$0xff] %v1165
          %1198 = vst [vmem:[%s330 + $0x8] sm:$0xff] %v1166
          %1199 = vst [vmem:[%s330 + $0x10] sm:$0xff] %v1167
          %1200 = vst [vmem:[%s330 + $0x18] sm:$0xff] %v1168
          %1201 = vst [vmem:[%s330 + $0x20] sm:$0xff] %v1169
          %1202 = vst [vmem:[%s330 + $0x28] sm:$0xff] %v1170
          %1203 = vst [vmem:[%s330 + $0x30] sm:$0xff] %v1171
          %1204 = vst [vmem:[%s330 + $0x38] sm:$0xff] %v1172
          %1205 = vst [vmem:[%s330 + $0x40] sm:$0xff] %v1173
          %1206 = vst [vmem:[%s330 + $0x48] sm:$0xff] %v1174
          %1207 = vst [vmem:[%s330 + $0x50] sm:$0xff] %v1175
          %1208 = vst [vmem:[%s330 + $0x58] sm:$0xff] %v1176
          %1209 = vst [vmem:[%s330 + $0x60] sm:$0xff] %v1177
          %1210 = vst [vmem:[%s330 + $0x68] sm:$0xff] %v1178
          %1211 = vst [vmem:[%s330 + $0x70] sm:$0xff] %v1179
          %1212 = vst [vmem:[%s330 + $0x78] sm:$0xff] %v1180
          %1213 = vst [vmem:[%s330 + $0x80] sm:$0xff] %v1181
          %1214 = vst [vmem:[%s330 + $0x88] sm:$0xff] %v1182
          %1215 = vst [vmem:[%s330 + $0x90] sm:$0xff] %v1183
          %1216 = vst [vmem:[%s330 + $0x98] sm:$0xff] %v1184
          %1217 = vst [vmem:[%s330 + $0xa0] sm:$0xff] %v1185
          %1218 = vst [vmem:[%s330 + $0xa8] sm:$0xff] %v1186
          %1219 = vst [vmem:[%s330 + $0xb0] sm:$0xff] %v1187
          %1220 = vst [vmem:[%s330 + $0xb8] sm:$0xff] %v1188
          %1221 = vst [vmem:[%s330 + $0xc0] sm:$0xff] %v1189
          %1222 = vst [vmem:[%s330 + $0xc8] sm:$0xff] %v1190
          %1223 = vst [vmem:[%s330 + $0xd0] sm:$0xff] %v1191
          %1224 = vst [vmem:[%s330 + $0xd8] sm:$0xff] %v1192
          %1225 = vst [vmem:[%s330 + $0xe0] sm:$0xff] %v1193
          %1226 = vst [vmem:[%s330 + $0xe8] sm:$0xff] %v1194
          %1227 = vst [vmem:[%s330 + $0xf0] sm:$0xff] %v1195
          %1228 = vst [vmem:[%s330 + $0xf8] sm:$0xff] %v1196
        $region60: #{net_forward.1} parent=35 // pred_fallthru
          _
        // Predicated region
        $region61: #{net_forward.1} parent=35 // pred_check
          %p1229 = pneg %p333
        $region62: #{net_forward.1} parent=35 // pred_check_branch
          %1231 = sbr.rel (%p1229) target = $region64
        $region63: #{net_forward.1} parent=35 // pred_region
          %v1232 = vld [vmem:[%s330] sm:$0xff]
          %v1233 = vld [vmem:[%s330 + $0x8] sm:$0xff]
          %v1234 = vld [vmem:[%s330 + $0x10] sm:$0xff]
          %v1235 = vld [vmem:[%s330 + $0x18] sm:$0xff]
          %v1236 = vld [vmem:[%s330 + $0x20] sm:$0xff]
          %v1237 = vld [vmem:[%s330 + $0x28] sm:$0xff]
          %v1238 = vld [vmem:[%s330 + $0x30] sm:$0xff]
          %v1239 = vld [vmem:[%s330 + $0x38] sm:$0xff]
          %v1240 = vld [vmem:[%s330 + $0x40] sm:$0xff]
          %v1241 = vld [vmem:[%s330 + $0x48] sm:$0xff]
          %v1242 = vld [vmem:[%s330 + $0x50] sm:$0xff]
          %v1243 = vld [vmem:[%s330 + $0x58] sm:$0xff]
          %v1244 = vld [vmem:[%s330 + $0x60] sm:$0xff]
          %v1245 = vld [vmem:[%s330 + $0x68] sm:$0xff]
          %v1246 = vld [vmem:[%s330 + $0x70] sm:$0xff]
          %v1247 = vld [vmem:[%s330 + $0x78] sm:$0xff]
          %v1248 = vld [vmem:[%s330 + $0x80] sm:$0xff]
          %v1249 = vld [vmem:[%s330 + $0x88] sm:$0xff]
          %v1250 = vld [vmem:[%s330 + $0x90] sm:$0xff]
          %v1251 = vld [vmem:[%s330 + $0x98] sm:$0xff]
          %v1252 = vld [vmem:[%s330 + $0xa0] sm:$0xff]
          %v1253 = vld [vmem:[%s330 + $0xa8] sm:$0xff]
          %v1254 = vld [vmem:[%s330 + $0xb0] sm:$0xff]
          %v1255 = vld [vmem:[%s330 + $0xb8] sm:$0xff]
          %v1256 = vld [vmem:[%s330 + $0xc0] sm:$0xff]
          %v1257 = vld [vmem:[%s330 + $0xc8] sm:$0xff]
          %v1258 = vld [vmem:[%s330 + $0xd0] sm:$0xff]
          %v1259 = vld [vmem:[%s330 + $0xd8] sm:$0xff]
          %v1260 = vld [vmem:[%s330 + $0xe0] sm:$0xff]
          %v1261 = vld [vmem:[%s330 + $0xe8] sm:$0xff]
          %v1262 = vld [vmem:[%s330 + $0xf0] sm:$0xff]
          %v1263 = vld [vmem:[%s330 + $0xf8] sm:$0xff]
          %v1264 = vld [vmem:[%s283] sm:$0xff]
          %v1265 = vld [vmem:[%s283 + $0x8] sm:$0xff]
          %v1266 = vld [vmem:[%s283 + $0x10] sm:$0xff]
          %v1267 = vld [vmem:[%s283 + $0x18] sm:$0xff]
          %v1268 = vld [vmem:[%s283 + $0x20] sm:$0xff]
          %v1269 = vld [vmem:[%s283 + $0x28] sm:$0xff]
          %v1270 = vld [vmem:[%s283 + $0x30] sm:$0xff]
          %v1271 = vld [vmem:[%s283 + $0x38] sm:$0xff]
          %v1272 = vld [vmem:[%s283 + $0x40] sm:$0xff]
          %v1273 = vld [vmem:[%s283 + $0x48] sm:$0xff]
          %v1274 = vld [vmem:[%s283 + $0x50] sm:$0xff]
          %v1275 = vld [vmem:[%s283 + $0x58] sm:$0xff]
          %v1276 = vld [vmem:[%s283 + $0x60] sm:$0xff]
          %v1277 = vld [vmem:[%s283 + $0x68] sm:$0xff]
          %v1278 = vld [vmem:[%s283 + $0x70] sm:$0xff]
          %v1279 = vld [vmem:[%s283 + $0x78] sm:$0xff]
          %v1280 = vld [vmem:[%s324] sm:$0x1]
          %v1282 = vlaneseq
          %v1283 = vshrl.u32 %v1282, 7
          %v1284 = vsub.s32 0, %v1283
          %v1285 = vrot.slane %v1280, %v1284
          %1287 = vmatprep.subr.mxu0 0.0
          %1288 = vmatpush1.msra.mxu0 %v1264
          %1289 = vmatprep.subr.mxu0 0.0
          %1290 = vmatpush1.msra.mxu0 %v1265
          %1291 = vmatprep.subr.mxu0 0.0
          %1292 = vmatpush1.msra.mxu0 %v1266
          %1293 = vmatprep.subr.mxu0 0.0
          %1294 = vmatpush1.msra.mxu0 %v1267
          %1295 = vmatprep.subr.mxu0 0.0
          %1296 = vmatpush1.msra.mxu0 %v1268
          %1297 = vmatprep.subr.mxu0 0.0
          %1298 = vmatpush1.msra.mxu0 %v1269
          %1299 = vmatprep.subr.mxu0 0.0
          %1300 = vmatpush1.msra.mxu0 %v1270
          %1301 = vmatprep.subr.mxu0 0.0
          %1302 = vmatpush1.msra.mxu0 %v1271
          %1303 = vmatprep.subr.mxu0 0.0
          %1304 = vmatpush1.msra.mxu0 %v1272
          %1305 = vmatprep.subr.mxu0 0.0
          %1306 = vmatpush1.msra.mxu0 %v1273
          %1307 = vmatprep.subr.mxu0 0.0
          %1308 = vmatpush1.msra.mxu0 %v1274
          %1309 = vmatprep.subr.mxu0 0.0
          %1310 = vmatpush1.msra.mxu0 %v1275
          %1311 = vmatprep.subr.mxu0 0.0
          %1312 = vmatpush1.msra.mxu0 %v1276
          %1313 = vmatprep.subr.mxu0 0.0
          %1314 = vmatpush1.msra.mxu0 %v1277
          %1315 = vmatprep.subr.mxu0 0.0
          %1316 = vmatpush1.msra.mxu0 %v1278
          %1317 = vmatprep.subr.mxu0 0.0
          %1318 = vmatpush1.msra.mxu0 %v1279
          %1319 = vmatprep.subr.mxu0 0.0
          %1320 = vmatpush1.msra.mxu0 0.0
          %1321 = vmatprep.subr.mxu0 0.0
          %1322 = vmatpush1.msra.mxu0 0.0
          %1323 = vmatprep.subr.mxu0 0.0
          %1324 = vmatpush1.msra.mxu0 0.0
          %1325 = vmatprep.subr.mxu0 0.0
          %1326 = vmatpush1.msra.mxu0 0.0
          %1327 = vmatprep.subr.mxu0 0.0
          %1328 = vmatpush1.msra.mxu0 0.0
          %1329 = vmatprep.subr.mxu0 0.0
          %1330 = vmatpush1.msra.mxu0 0.0
          %1331 = vmatprep.subr.mxu0 0.0
          %1332 = vmatpush1.msra.mxu0 0.0
          %1333 = vmatprep.subr.mxu0 0.0
          %1334 = vmatpush1.msra.mxu0 0.0
          %1335 = vmatprep.subr.mxu0 0.0
          %1336 = vmatpush1.msra.mxu0 0.0
          %1337 = vmatprep.subr.mxu0 0.0
          %1338 = vmatpush1.msra.mxu0 0.0
          %1339 = vmatprep.subr.mxu0 0.0
          %1340 = vmatpush1.msra.mxu0 0.0
          %1341 = vmatprep.subr.mxu0 0.0
          %1342 = vmatpush1.msra.mxu0 0.0
          %1343 = vmatprep.subr.mxu0 0.0
          %1344 = vmatpush1.msra.mxu0 0.0
          %1345 = vmatprep.subr.mxu0 0.0
          %1346 = vmatpush1.msra.mxu0 0.0
          %1347 = vmatprep.subr.mxu0 0.0
          %1348 = vmatpush1.msra.mxu0 0.0
          %1349 = vmatprep.subr.mxu0 0.0
          %1350 = vmatpush1.msra.mxu0 0.0
          %1351 = vmatprep.mubr.f32.mxu0 0.0
          %1352 = vmatmul.mubr.f32.gmra.mrb[0].mxu0 %v1232
          %v1353 = vpop.f32.mrb[0].mxu0
          %v1354 = vadd.f32 %v1285, %v1353
          %v1355 = vpop.f32.mrb[0].mxu0
          %1356 = vmatprep.mubr.f32.mxu0 0.0
          %1357 = vmatmul.mubr.f32.gmra.mrb[0].mxu0 %v1233
          %v1358 = vpop.f32.mrb[0].mxu0
          %v1359 = vadd.f32 %v1285, %v1358
          %v1360 = vpop.f32.mrb[0].mxu0
          %1361 = vmatprep.mubr.f32.mxu0 0.0
          %1362 = vmatmul.mubr.f32.gmra.mrb[0].mxu0 %v1234
          %v1363 = vpop.f32.mrb[0].mxu0
          %v1364 = vadd.f32 %v1285, %v1363
          %v1365 = vpop.f32.mrb[0].mxu0
          %1366 = vmatprep.mubr.f32.mxu0 0.0
          %1367 = vmatmul.mubr.f32.gmra.mrb[0].mxu0 %v1235
          %v1368 = vpop.f32.mrb[0].mxu0
          %v1369 = vadd.f32 %v1285, %v1368
          %v1370 = vpop.f32.mrb[0].mxu0
          %1371 = vmatprep.mubr.f32.mxu0 0.0
          %1372 = vmatmul.mubr.f32.gmra.mrb[0].mxu0 %v1236
          %v1373 = vpop.f32.mrb[0].mxu0
          %v1374 = vadd.f32 %v1285, %v1373
          %v1375 = vpop.f32.mrb[0].mxu0
          %1376 = vmatprep.mubr.f32.mxu0 0.0
          %1377 = vmatmul.mubr.f32.gmra.mrb[0].mxu0 %v1237
          %v1378 = vpop.f32.mrb[0].mxu0
          %v1379 = vadd.f32 %v1285, %v1378
          %v1380 = vpop.f32.mrb[0].mxu0
          %1381 = vmatprep.mubr.f32.mxu0 0.0
          %1382 = vmatmul.mubr.f32.gmra.mrb[0].mxu0 %v1238
          %v1383 = vpop.f32.mrb[0].mxu0
          %v1384 = vadd.f32 %v1285, %v1383
          %v1385 = vpop.f32.mrb[0].mxu0
          %1386 = vmatprep.mubr.f32.mxu0 0.0
          %1387 = vmatmul.mubr.f32.gmra.mrb[0].mxu0 %v1239
          %v1388 = vpop.f32.mrb[0].mxu0
          %v1389 = vadd.f32 %v1285, %v1388
          %v1390 = vpop.f32.mrb[0].mxu0
          %1391 = vmatprep.mubr.f32.mxu0 0.0
          %1392 = vmatmul.mubr.f32.gmra.mrb[0].mxu0 %v1240
          %v1393 = vpop.f32.mrb[0].mxu0
          %v1394 = vadd.f32 %v1285, %v1393
          %v1395 = vpop.f32.mrb[0].mxu0
          %1396 = vmatprep.mubr.f32.mxu0 0.0
          %1397 = vmatmul.mubr.f32.gmra.mrb[0].mxu0 %v1241
          %v1398 = vpop.f32.mrb[0].mxu0
          %v1399 = vadd.f32 %v1285, %v1398
          %v1400 = vpop.f32.mrb[0].mxu0
          %1401 = vmatprep.mubr.f32.mxu0 0.0
          %1402 = vmatmul.mubr.f32.gmra.mrb[0].mxu0 %v1242
          %v1403 = vpop.f32.mrb[0].mxu0
          %v1404 = vadd.f32 %v1285, %v1403
          %v1405 = vpop.f32.mrb[0].mxu0
          %1406 = vmatprep.mubr.f32.mxu0 0.0
          %1407 = vmatmul.mubr.f32.gmra.mrb[0].mxu0 %v1243
          %v1408 = vpop.f32.mrb[0].mxu0
          %v1409 = vadd.f32 %v1285, %v1408
          %v1410 = vpop.f32.mrb[0].mxu0
          %1411 = vmatprep.mubr.f32.mxu0 0.0
          %1412 = vmatmul.mubr.f32.gmra.mrb[0].mxu0 %v1244
          %v1413 = vpop.f32.mrb[0].mxu0
          %v1414 = vadd.f32 %v1285, %v1413
          %v1415 = vpop.f32.mrb[0].mxu0
          %1416 = vmatprep.mubr.f32.mxu0 0.0
          %1417 = vmatmul.mubr.f32.gmra.mrb[0].mxu0 %v1245
          %v1418 = vpop.f32.mrb[0].mxu0
          %v1419 = vadd.f32 %v1285, %v1418
          %v1420 = vpop.f32.mrb[0].mxu0
          %1421 = vmatprep.mubr.f32.mxu0 0.0
          %1422 = vmatmul.mubr.f32.gmra.mrb[0].mxu0 %v1246
          %v1423 = vpop.f32.mrb[0].mxu0
          %v1424 = vadd.f32 %v1285, %v1423
          %v1425 = vpop.f32.mrb[0].mxu0
          %1426 = vmatprep.mubr.f32.mxu0 0.0
          %1427 = vmatmul.mubr.f32.gmra.mrb[0].mxu0 %v1247
          %v1428 = vpop.f32.mrb[0].mxu0
          %v1429 = vadd.f32 %v1285, %v1428
          %v1430 = vpop.f32.mrb[0].mxu0
          %1431 = vmatprep.mubr.f32.mxu0 0.0
          %1432 = vmatmul.mubr.f32.gmra.mrb[0].mxu0 %v1248
          %v1433 = vpop.f32.mrb[0].mxu0
          %v1434 = vadd.f32 %v1285, %v1433
          %v1435 = vpop.f32.mrb[0].mxu0
          %1436 = vmatprep.mubr.f32.mxu0 0.0
          %1437 = vmatmul.mubr.f32.gmra.mrb[0].mxu0 %v1249
          %v1438 = vpop.f32.mrb[0].mxu0
          %v1439 = vadd.f32 %v1285, %v1438
          %v1440 = vpop.f32.mrb[0].mxu0
          %1441 = vmatprep.mubr.f32.mxu0 0.0
          %1442 = vmatmul.mubr.f32.gmra.mrb[0].mxu0 %v1250
          %v1443 = vpop.f32.mrb[0].mxu0
          %v1444 = vadd.f32 %v1285, %v1443
          %v1445 = vpop.f32.mrb[0].mxu0
          %1446 = vmatprep.mubr.f32.mxu0 0.0
          %1447 = vmatmul.mubr.f32.gmra.mrb[0].mxu0 %v1251
          %v1448 = vpop.f32.mrb[0].mxu0
          %v1449 = vadd.f32 %v1285, %v1448
          %v1450 = vpop.f32.mrb[0].mxu0
          %1451 = vmatprep.mubr.f32.mxu0 0.0
          %1452 = vmatmul.mubr.f32.gmra.mrb[0].mxu0 %v1252
          %v1453 = vpop.f32.mrb[0].mxu0
          %v1454 = vadd.f32 %v1285, %v1453
          %v1455 = vpop.f32.mrb[0].mxu0
          %1456 = vmatprep.mubr.f32.mxu0 0.0
          %1457 = vmatmul.mubr.f32.gmra.mrb[0].mxu0 %v1253
          %v1458 = vpop.f32.mrb[0].mxu0
          %v1459 = vadd.f32 %v1285, %v1458
          %v1460 = vpop.f32.mrb[0].mxu0
          %1461 = vmatprep.mubr.f32.mxu0 0.0
          %1462 = vmatmul.mubr.f32.gmra.mrb[0].mxu0 %v1254
          %v1463 = vpop.f32.mrb[0].mxu0
          %v1464 = vadd.f32 %v1285, %v1463
          %v1465 = vpop.f32.mrb[0].mxu0
          %1466 = vmatprep.mubr.f32.mxu0 0.0
          %1467 = vmatmul.mubr.f32.gmra.mrb[0].mxu0 %v1255
          %v1468 = vpop.f32.mrb[0].mxu0
          %v1469 = vadd.f32 %v1285, %v1468
          %v1470 = vpop.f32.mrb[0].mxu0
          %1471 = vmatprep.mubr.f32.mxu0 0.0
          %1472 = vmatmul.mubr.f32.gmra.mrb[0].mxu0 %v1256
          %v1473 = vpop.f32.mrb[0].mxu0
          %v1474 = vadd.f32 %v1285, %v1473
          %v1475 = vpop.f32.mrb[0].mxu0
          %1476 = vmatprep.mubr.f32.mxu0 0.0
          %1477 = vmatmul.mubr.f32.gmra.mrb[0].mxu0 %v1257
          %v1478 = vpop.f32.mrb[0].mxu0
          %v1479 = vadd.f32 %v1285, %v1478
          %v1480 = vpop.f32.mrb[0].mxu0
          %1481 = vmatprep.mubr.f32.mxu0 0.0
          %1482 = vmatmul.mubr.f32.gmra.mrb[0].mxu0 %v1258
          %v1483 = vpop.f32.mrb[0].mxu0
          %v1484 = vadd.f32 %v1285, %v1483
          %v1485 = vpop.f32.mrb[0].mxu0
          %1486 = vmatprep.mubr.f32.mxu0 0.0
          %1487 = vmatmul.mubr.f32.gmra.mrb[0].mxu0 %v1259
          %v1488 = vpop.f32.mrb[0].mxu0
          %v1489 = vadd.f32 %v1285, %v1488
          %v1490 = vpop.f32.mrb[0].mxu0
          %1491 = vmatprep.mubr.f32.mxu0 0.0
          %1492 = vmatmul.mubr.f32.gmra.mrb[0].mxu0 %v1260
          %v1493 = vpop.f32.mrb[0].mxu0
          %v1494 = vadd.f32 %v1285, %v1493
          %v1495 = vpop.f32.mrb[0].mxu0
          %1496 = vmatprep.mubr.f32.mxu0 0.0
          %1497 = vmatmul.mubr.f32.gmra.mrb[0].mxu0 %v1261
          %v1498 = vpop.f32.mrb[0].mxu0
          %v1499 = vadd.f32 %v1285, %v1498
          %v1500 = vpop.f32.mrb[0].mxu0
          %1501 = vmatprep.mubr.f32.mxu0 0.0
          %1502 = vmatmul.mubr.f32.gmra.mrb[0].mxu0 %v1262
          %v1503 = vpop.f32.mrb[0].mxu0
          %v1504 = vadd.f32 %v1285, %v1503
          %v1505 = vpop.f32.mrb[0].mxu0
          %1506 = vmatprep.mubr.f32.mxu0 0.0
          %1507 = vmatmul.mubr.f32.gmra.mrb[0].mxu0 %v1263
          %v1508 = vpop.f32.mrb[0].mxu0
          %v1509 = vadd.f32 %v1285, %v1508
          %v1510 = vpop.f32.mrb[0].mxu0
          %1511 = vdwg.mxu0
          // Predicated region
          $region65: #{net_forward.1} parent=63 // pred_check
            %p1512 = pneg %p513
          $region66: #{net_forward.1} parent=63 // pred_check_branch
            %1514 = sbr.rel (%p1512) target = $region68
          $region67: #{net_forward.1} parent=63 // pred_region
            %v1515 = vmax.f32 %v1354, 0.0
            %v1516 = vmax.f32 %v1359, 0.0
            %v1517 = vmax.f32 %v1364, 0.0
            %v1518 = vmax.f32 %v1369, 0.0
            %v1519 = vmax.f32 %v1374, 0.0
            %v1520 = vmax.f32 %v1379, 0.0
            %v1521 = vmax.f32 %v1384, 0.0
            %v1522 = vmax.f32 %v1389, 0.0
            %v1523 = vmax.f32 %v1394, 0.0
            %v1524 = vmax.f32 %v1399, 0.0
            %v1525 = vmax.f32 %v1404, 0.0
            %v1526 = vmax.f32 %v1409, 0.0
            %v1527 = vmax.f32 %v1414, 0.0
            %v1528 = vmax.f32 %v1419, 0.0
            %v1529 = vmax.f32 %v1424, 0.0
            %v1530 = vmax.f32 %v1429, 0.0
            %v1531 = vmax.f32 %v1434, 0.0
            %v1532 = vmax.f32 %v1439, 0.0
            %v1533 = vmax.f32 %v1444, 0.0
            %v1534 = vmax.f32 %v1449, 0.0
            %v1535 = vmax.f32 %v1454, 0.0
            %v1536 = vmax.f32 %v1459, 0.0
            %v1537 = vmax.f32 %v1464, 0.0
            %v1538 = vmax.f32 %v1469, 0.0
            %v1539 = vmax.f32 %v1474, 0.0
            %v1540 = vmax.f32 %v1479, 0.0
            %v1541 = vmax.f32 %v1484, 0.0
            %v1542 = vmax.f32 %v1489, 0.0
            %v1543 = vmax.f32 %v1494, 0.0
            %v1544 = vmax.f32 %v1499, 0.0
            %v1545 = vmax.f32 %v1504, 0.0
            %v1546 = vmax.f32 %v1509, 0.0
            %s1547 = smul.u32 %s25, 256
            %s1548 = scalar_lea.vmem [#allocation2], %s1547
            %1549 = vst [vmem:[%s1548] sm:$0xff] %v1515
            %1550 = vst [vmem:[%s1548 + $0x8] sm:$0xff] %v1516
            %1551 = vst [vmem:[%s1548 + $0x10] sm:$0xff] %v1517
            %1552 = vst [vmem:[%s1548 + $0x18] sm:$0xff] %v1518
            %1553 = vst [vmem:[%s1548 + $0x20] sm:$0xff] %v1519
            %1554 = vst [vmem:[%s1548 + $0x28] sm:$0xff] %v1520
            %1555 = vst [vmem:[%s1548 + $0x30] sm:$0xff] %v1521
            %1556 = vst [vmem:[%s1548 + $0x38] sm:$0xff] %v1522
            %1557 = vst [vmem:[%s1548 + $0x40] sm:$0xff] %v1523
            %1558 = vst [vmem:[%s1548 + $0x48] sm:$0xff] %v1524
            %1559 = vst [vmem:[%s1548 + $0x50] sm:$0xff] %v1525
            %1560 = vst [vmem:[%s1548 + $0x58] sm:$0xff] %v1526
            %1561 = vst [vmem:[%s1548 + $0x60] sm:$0xff] %v1527
            %1562 = vst [vmem:[%s1548 + $0x68] sm:$0xff] %v1528
            %1563 = vst [vmem:[%s1548 + $0x70] sm:$0xff] %v1529
            %1564 = vst [vmem:[%s1548 + $0x78] sm:$0xff] %v1530
            %1565 = vst [vmem:[%s1548 + $0x80] sm:$0xff] %v1531
            %1566 = vst [vmem:[%s1548 + $0x88] sm:$0xff] %v1532
            %1567 = vst [vmem:[%s1548 + $0x90] sm:$0xff] %v1533
            %1568 = vst [vmem:[%s1548 + $0x98] sm:$0xff] %v1534
            %1569 = vst [vmem:[%s1548 + $0xa0] sm:$0xff] %v1535
            %1570 = vst [vmem:[%s1548 + $0xa8] sm:$0xff] %v1536
            %1571 = vst [vmem:[%s1548 + $0xb0] sm:$0xff] %v1537
            %1572 = vst [vmem:[%s1548 + $0xb8] sm:$0xff] %v1538
            %1573 = vst [vmem:[%s1548 + $0xc0] sm:$0xff] %v1539
            %1574 = vst [vmem:[%s1548 + $0xc8] sm:$0xff] %v1540
            %1575 = vst [vmem:[%s1548 + $0xd0] sm:$0xff] %v1541
            %1576 = vst [vmem:[%s1548 + $0xd8] sm:$0xff] %v1542
            %1577 = vst [vmem:[%s1548 + $0xe0] sm:$0xff] %v1543
            %1578 = vst [vmem:[%s1548 + $0xe8] sm:$0xff] %v1544
            %1579 = vst [vmem:[%s1548 + $0xf0] sm:$0xff] %v1545
            %1580 = vst [vmem:[%s1548 + $0xf8] sm:$0xff] %v1546
          $region68: #{net_forward.1} parent=63 // pred_fallthru
            _
          // Predicated region
          $region69: #{net_forward.1} parent=63 // pred_check
            %p1581 = pneg %p870
          $region70: #{net_forward.1} parent=63 // pred_check_branch
            %1583 = sbr.rel (%p1581) target = $region72
          $region71: #{net_forward.1} parent=63 // pred_region
            %1584 = vst [vmem:[%s330] sm:$0xff] %v1354
            %1585 = vst [vmem:[%s330 + $0x8] sm:$0xff] %v1359
            %1586 = vst [vmem:[%s330 + $0x10] sm:$0xff] %v1364
            %1587 = vst [vmem:[%s330 + $0x18] sm:$0xff] %v1369
            %1588 = vst [vmem:[%s330 + $0x20] sm:$0xff] %v1374
            %1589 = vst [vmem:[%s330 + $0x28] sm:$0xff] %v1379
            %1590 = vst [vmem:[%s330 + $0x30] sm:$0xff] %v1384
            %1591 = vst [vmem:[%s330 + $0x38] sm:$0xff] %v1389
            %1592 = vst [vmem:[%s330 + $0x40] sm:$0xff] %v1394
            %1593 = vst [vmem:[%s330 + $0x48] sm:$0xff] %v1399
            %1594 = vst [vmem:[%s330 + $0x50] sm:$0xff] %v1404
            %1595 = vst [vmem:[%s330 + $0x58] sm:$0xff] %v1409
            %1596 = vst [vmem:[%s330 + $0x60] sm:$0xff] %v1414
            %1597 = vst [vmem:[%s330 + $0x68] sm:$0xff] %v1419
            %1598 = vst [vmem:[%s330 + $0x70] sm:$0xff] %v1424
            %1599 = vst [vmem:[%s330 + $0x78] sm:$0xff] %v1429
            %1600 = vst [vmem:[%s330 + $0x80] sm:$0xff] %v1434
            %1601 = vst [vmem:[%s330 + $0x88] sm:$0xff] %v1439
            %1602 = vst [vmem:[%s330 + $0x90] sm:$0xff] %v1444
            %1603 = vst [vmem:[%s330 + $0x98] sm:$0xff] %v1449
            %1604 = vst [vmem:[%s330 + $0xa0] sm:$0xff] %v1454
            %1605 = vst [vmem:[%s330 + $0xa8] sm:$0xff] %v1459
            %1606 = vst [vmem:[%s330 + $0xb0] sm:$0xff] %v1464
            %1607 = vst [vmem:[%s330 + $0xb8] sm:$0xff] %v1469
            %1608 = vst [vmem:[%s330 + $0xc0] sm:$0xff] %v1474
            %1609 = vst [vmem:[%s330 + $0xc8] sm:$0xff] %v1479
            %1610 = vst [vmem:[%s330 + $0xd0] sm:$0xff] %v1484
            %1611 = vst [vmem:[%s330 + $0xd8] sm:$0xff] %v1489
            %1612 = vst [vmem:[%s330 + $0xe0] sm:$0xff] %v1494
            %1613 = vst [vmem:[%s330 + $0xe8] sm:$0xff] %v1499
            %1614 = vst [vmem:[%s330 + $0xf0] sm:$0xff] %v1504
            %1615 = vst [vmem:[%s330 + $0xf8] sm:$0xff] %v1509
          $region72: #{net_forward.1} parent=63 // pred_fallthru
            _
        $region64: #{net_forward.1} parent=35 // pred_fallthru
          _
        %s1616 = smul.u32 %s25, %s24
        %s1617 = smul.u32 32, %s1616
        %p1618 = scmp.lt.s32.totalorder %s1617, 31
        %s1619 = scalar_select %p1618, %s1617, 31
        %s1620 = smul.addr %s1619, 8
        %s1621 = scalar_lea.vmem %s4, %s1620
        // Predicated region
        $region73: #{net_forward.1} parent=35 // pred_check
          %p1622 = pneg %p168
        $region74: #{net_forward.1} parent=35 // pred_check_branch
          %1624 = sbr.rel (%p1622) target = $region76
        $region75: #{net_forward.1} parent=35 // pred_region
          %s1625 = smul.u32 %s25, %s24
          %s1626 = smul.u32 32, %s1625
        $region76: #{net_forward.1} parent=35 // pred_fallthru
          _
      $region36: #{net_forward.1} parent=5 // pred_fallthru
        _
      %p1627 = scmp.le.s32.totalorder 2, %s14
      // Predicated region
      $region77: #{net_forward.1} parent=5 // pred_check
        %p1628 = pneg %p1627
      $region78: #{net_forward.1} parent=5 // pred_check_branch
        %1630 = sbr.rel (%p1628) target = $region80
      $region79: #{net_forward.1} parent=5 // pred_region
        %s1631 = ssub.s32 %s14, 2
        // Predicated region
        $region81: #{net_forward.1} parent=79 // pred_check
          %p1632 = pneg %p174
        $region82: #{net_forward.1} parent=79 // pred_check_branch
          %1634 = sbr.rel (%p1632) target = $region84
        $region83: #{net_forward.1} parent=79 // pred_region
          %s1635 = smul.u32 %s28, %s27
          %s1636 = smul.u32 32, %s1635
          %p1637 = scmp.lt.s32.totalorder %s1636, 31
          %s1638 = scalar_select %p1637, %s1636, 31
          %s1639 = smul.addr %s1638, 8
          %s1640 = scalar_lea.vmem %s4, %s1639
        $region84: #{net_forward.1} parent=79 // pred_fallthru
          _
      $region80: #{net_forward.1} parent=5 // pred_fallthru
        _
    $region6: #{net_forward.1} parent=1 // loop_footer
      %s18 = sadd.s32 1, %s14
    $region7: #{net_forward.1} parent=1 // loop_footer_branch
      %13 = sbr.rel target = $region3
    $region8: #{net_forward.1} parent=1 // loop_exit
      _
    %1641 = vsyncpa [#allocation4], 1
    %s1642 = scalar_lea.sflag [#allocation4], 1
    %1643 = vsyncpa %s1642, 1
    %1644 = vsyncpa [#allocation6], 1
    %s1645 = scalar_lea.sflag [#allocation6], 1
    %1646 = vsyncpa %s1645, 1

</llo_original>
